<compile_context>
chip_gen: v6e
topology: v6e:2x2x1
jax: 0.10.0
libtpu: 0.0.40
codegen_flags: <defaults>
</compile_context>

<pallas_src>
import functools

import jax
import jax.numpy as jnp
from jax import lax
from jax.experimental import pallas as pl
from jax.experimental.pallas import tpu as pltpu

_SUBLANE = 8    # f32 sublane tile
_LANE = 128     # lane tile


def _round_up(x, m):
    return (x + m - 1) // m * m


def _lstm_kernel(num_layers, seq_len, batch_pad, hidden_size, *refs):
    """Whole LSTM forward in a single kernel invocation (everything resident in VMEM).

    refs = [x_ref (T*Bp, I) bf16,
            (wih_ref bf16, whh_ref bf16, b_ref f32) * num_layers   # gate order [i,f,o,g]
            wfc_ref (H, OUT_PAD) bf16, bfc_ref (1, OUT_PAD) f32,
            out_ref (Bp, OUT_PAD) f32]
    """
    x_ref = refs[0]
    layer_refs = refs[1:1 + 3 * num_layers]
    wfc_ref = refs[1 + 3 * num_layers]
    bfc_ref = refs[2 + 3 * num_layers]
    out_ref = refs[3 + 3 * num_layers]

    H = hidden_size
    Bp = batch_pad
    T = seq_len

    # Lane mask: lanes >= 3H hold the g (cell-candidate) gate -> tanh; others sigmoid.
    gate_lane = lax.broadcasted_iota(jnp.int32, (Bp, 4 * H), 1)
    is_g_lane = gate_lane >= 3 * H

    src = x_ref[...]                             # (T*Bp, in_dim), bf16 MXU operand
    h = jnp.zeros((Bp, H), jnp.float32)
    for l in range(num_layers):                  # static layer loop
        wih = layer_refs[3 * l][...]             # (in_dim, 4H) bf16
        whh = layer_refs[3 * l + 1][...]         # (H, 4H)      bf16
        b = layer_refs[3 * l + 2][...]           # (1, 4H)      f32

        # Hoisted input projection: one matmul over all timesteps (M = T*Bp), bias
        # added once.  Kept as a value in vregs (8 vregs at demo scale) — no scratch.
        gx = jnp.dot(src, wih, preferred_element_type=jnp.float32) + b   # (T*Bp, 4H) f32

        h = jnp.zeros((Bp, H), jnp.float32)
        c = jnp.zeros((Bp, H), jnp.float32)
        hs = []
        # Static time loop (T small & static at demo scale); static sublane-aligned
        # slices of gx.  TODO(synk): partial-unroll fori_loop for production T.
        for t in range(T):
            # Accumulation-style so v7x MRB can accumulate the dot into gx_t in place.
            gates = gx[t * Bp:(t + 1) * Bp, :]
            gates = gates + jnp.dot(h.astype(jnp.bfloat16), whh,
                                    preferred_element_type=jnp.float32)   # (Bp, 4H) f32
            # Full-width EUP passes + lane-mask select; slices only on the activated
            # value.  Gate order (lanes) = [i, f, o, g].
            act = jnp.where(is_g_lane, jnp.tanh(gates), jax.nn.sigmoid(gates))
            i_g = act[:, 0 * H:1 * H]
            f_g = act[:, 1 * H:2 * H]
            o_g = act[:, 2 * H:3 * H]
            g_g = act[:, 3 * H:4 * H]
            c = f_g * c + i_g * g_g
            h = o_g * jnp.tanh(c)
            hs.append(h)

        if l + 1 < num_layers:
            # Next layer's input sequence stays in vregs (no lane-sparse seq_buf store).
            src = jnp.concatenate(hs, axis=0).astype(jnp.bfloat16)       # (T*Bp, H)

    # FC on the last timestep of the top layer; lane-padded output -> unmasked store.
    out_ref[...] = (jnp.dot(h.astype(jnp.bfloat16), wfc_ref[...],
                            preferred_element_type=jnp.float32) + bfc_ref[...])


def init_raw_params(key, input_size, hidden_size, num_layers, output_size, future_seq):
    """Raw weights in PyTorch layout/ordering, U(-1/sqrt(H), 1/sqrt(H)) init."""
    k = 1.0 / jnp.sqrt(jnp.float32(hidden_size))
    raw = {}
    for l in range(num_layers):
        in_dim = input_size if l == 0 else hidden_size
        key, k1, k2, k3, k4 = jax.random.split(key, 5)
        raw[f"w_ih{l}"] = jax.random.uniform(k1, (4 * hidden_size, in_dim), jnp.float32, -k, k)
        raw[f"w_hh{l}"] = jax.random.uniform(k2, (4 * hidden_size, hidden_size), jnp.float32, -k, k)
        raw[f"b_ih{l}"] = jax.random.uniform(k3, (4 * hidden_size,), jnp.float32, -k, k)
        raw[f"b_hh{l}"] = jax.random.uniform(k4, (4 * hidden_size,), jnp.float32, -k, k)
    key, k1, k2 = jax.random.split(key, 3)
    out_dim = output_size * future_seq
    raw["w_fc"] = jax.random.uniform(k1, (out_dim, hidden_size), jnp.float32, -k, k)
    raw["b_fc"] = jax.random.uniform(k2, (out_dim,), jnp.float32, -k, k)
    return raw


def prepare_kernel_params(raw, *, hidden_size, num_layers, out_dim):
    """Transpose, fuse biases, permute gates [i,f,g,o]->[i,f,o,g], bf16 matmul weights,
    lane-pad the FC.  Biases stay f32 (added after the f32-accumulated dot)."""
    H = hidden_size
    out_pad = _round_up(out_dim, _LANE)

    def reorder(w):  # rows/entries ordered [i, f, g, o] -> [i, f, o, g]
        return jnp.concatenate([w[:2 * H], w[3 * H:4 * H], w[2 * H:3 * H]], axis=0)

    params = {}
    for l in range(num_layers):
        params[f"wih{l}"] = reorder(raw[f"w_ih{l}"]).T.astype(jnp.bfloat16)   # (in_dim, 4H)
        params[f"whh{l}"] = reorder(raw[f"w_hh{l}"]).T.astype(jnp.bfloat16)   # (H, 4H)
        params[f"b{l}"] = reorder(raw[f"b_ih{l}"] + raw[f"b_hh{l}"]).reshape(1, -1)
    wfc = raw["w_fc"].T                                                       # (H, out_dim)
    params["wfc"] = jnp.pad(wfc, ((0, 0), (0, out_pad - out_dim))).astype(jnp.bfloat16)
    params["bfc"] = jnp.pad(raw["b_fc"], (0, out_pad - out_dim)).reshape(1, -1)
    return params


def lstm_forward(params, x, *, hidden_size, num_layers, output_size, future_seq):
    assert num_layers >= 1
    B, T, I = x.shape
    out_dim = output_size * future_seq
    Bp = _round_up(max(B, 1), _SUBLANE)
    out_pad = _round_up(out_dim, _LANE)

    # time-major, batch padded to the sublane tile, flattened to (T*Bp, I), bf16
    # (x only feeds the MXU; elementwise math stays f32 in-kernel).
    x_tm = jnp.transpose(x, (1, 0, 2)).astype(jnp.float32)          # (T, B, I)
    if Bp != B:
        x_tm = jnp.pad(x_tm, ((0, 0), (0, Bp - B), (0, 0)))
    x2d = x_tm.reshape(T * Bp, I).astype(jnp.bfloat16)

    flat_inputs = [x2d]
    for l in range(num_layers):
        flat_inputs += [params[f"wih{l}"], params[f"whh{l}"], params[f"b{l}"]]
    flat_inputs += [params["wfc"], params["bfc"]]

    out = pl.pallas_call(
        functools.partial(_lstm_kernel, num_layers, T, Bp, hidden_size),
        out_shape=jax.ShapeDtypeStruct((Bp, out_pad), jnp.float32),
        in_specs=[pl.BlockSpec(memory_space=pltpu.MemorySpace.VMEM)] * len(flat_inputs),
        out_specs=pl.BlockSpec(memory_space=pltpu.MemorySpace.VMEM),
        compiler_params=pltpu.CompilerParams(vmem_limit_bytes=32 * 1024 * 1024),
    )(*flat_inputs)

    # matches out.view(-1, future_sequence_length, out.size(-1) // future_sequence_length)
    return out[:B, :out_dim].reshape(B, future_seq, output_size)


def lstm_reference_f32(raw, x, *, hidden_size, num_layers, output_size, future_seq):
    """Pure-f32 JAX reference replicating torch.nn.LSTM(batch_first=True) + Linear."""
    B, T, _ = x.shape
    H = hidden_size
    seq = x.astype(jnp.float32)
    for l in range(num_layers):
        wih = raw[f"w_ih{l}"].T
        whh = raw[f"w_hh{l}"].T
        b = (raw[f"b_ih{l}"] + raw[f"b_hh{l}"]).reshape(1, -1)
        h = jnp.zeros((B, H), jnp.float32)
        c = jnp.zeros((B, H), jnp.float32)
        outs = []
        for t in range(T):
            gates = seq[:, t] @ wih + h @ whh + b
            i_g = jax.nn.sigmoid(gates[:, 0 * H:1 * H])
            f_g = jax.nn.sigmoid(gates[:, 1 * H:2 * H])
            g_g = jnp.tanh(gates[:, 2 * H:3 * H])
            o_g = jax.nn.sigmoid(gates[:, 3 * H:4 * H])
            c = f_g * c + i_g * g_g
            h = o_g * jnp.tanh(c)
            outs.append(h)
        seq = jnp.stack(outs, axis=1)
    out = seq[:, -1] @ raw["w_fc"].T + raw["b_fc"]
    return out.reshape(-1, future_seq, output_size)


def lstm_reference_bf16ops(raw, x, *, hidden_size, num_layers, output_size, future_seq):
    """Reference matching the kernel numerics: bf16 matmul operands, f32 accumulate,
    f32 gate math."""
    B, T, _ = x.shape
    H = hidden_size
    bf = jnp.bfloat16
    seq = x.astype(jnp.float32)
    for l in range(num_layers):
        wih = raw[f"w_ih{l}"].T.astype(bf)
        whh = raw[f"w_hh{l}"].T.astype(bf)
        b = (raw[f"b_ih{l}"] + raw[f"b_hh{l}"]).reshape(1, -1)
        h = jnp.zeros((B, H), jnp.float32)
        c = jnp.zeros((B, H), jnp.float32)
        outs = []
        for t in range(T):
            gates = (jnp.dot(seq[:, t].astype(bf), wih, preferred_element_type=jnp.float32)
                     + jnp.dot(h.astype(bf), whh, preferred_element_type=jnp.float32) + b)
            i_g = jax.nn.sigmoid(gates[:, 0 * H:1 * H])
            f_g = jax.nn.sigmoid(gates[:, 1 * H:2 * H])
            g_g = jnp.tanh(gates[:, 2 * H:3 * H])
            o_g = jax.nn.sigmoid(gates[:, 3 * H:4 * H])
            c = f_g * c + i_g * g_g
            h = o_g * jnp.tanh(c)
            outs.append(h)
        seq = jnp.stack(outs, axis=1)
    out = (jnp.dot(seq[:, -1].astype(bf), raw["w_fc"].T.astype(bf),
                   preferred_element_type=jnp.float32) + raw["b_fc"])
    return out.reshape(-1, future_seq, output_size)


if __name__ == "__main__":
    # Shapes consistent with LSTMModel(input_size=4, hidden_size=32, num_layers=2,
    # output_size=3, future_sequence_length=5), batch=2, seq=8.
    input_size = 4
    hidden_size = 32
    num_layers = 2
    output_size = 3
    future_seq = 5
    batch, seq_len = 2, 8
    out_dim = output_size * future_seq

    key = jax.random.PRNGKey(0)
    key_x, key_p = jax.random.split(key)
    x = jax.random.normal(key_x, (batch, seq_len, input_size), jnp.float32)

    raw = init_raw_params(key_p, input_size, hidden_size, num_layers, output_size, future_seq)
    params = prepare_kernel_params(raw, hidden_size=hidden_size, num_layers=num_layers,
                                   out_dim=out_dim)

    y = lstm_forward(params, x, hidden_size=hidden_size, num_layers=num_layers,
                     output_size=output_size, future_seq=future_seq)
    y = jax.block_until_ready(y)
    assert y.shape == (batch, future_seq, output_size), y.shape

    # Tight check vs the numerics-matched (bf16-operand) reference.
    y_ref_bf16 = lstm_reference_bf16ops(raw, x, hidden_size=hidden_size,
                                        num_layers=num_layers, output_size=output_size,
                                        future_seq=future_seq)
    assert jnp.allclose(y, y_ref_bf16, atol=5e-4, rtol=1e-3), (y, y_ref_bf16)

    # Loose check vs the pure-f32 reference (bounds the bf16-operand quantization error).
    y_ref_f32 = lstm_reference_f32(raw, x, hidden_size=hidden_size, num_layers=num_layers,
                                   output_size=output_size, future_seq=future_seq)
    assert jnp.allclose(y, y_ref_f32, atol=5e-2, rtol=5e-2), (y, y_ref_f32)

    print("KERNEL_OK")
</pallas_src>

<mosaic_0001>
module attributes {stable_mosaic.version = 11 : i64} {
  func.func @_lstm_kernel(%arg0: memref<64x4xbf16, #tpu.memory_space<vmem>>, %arg1: memref<4x128xbf16, #tpu.memory_space<vmem>>, %arg2: memref<32x128xbf16, #tpu.memory_space<vmem>>, %arg3: memref<1x128xf32, #tpu.memory_space<vmem>>, %arg4: memref<32x128xbf16, #tpu.memory_space<vmem>>, %arg5: memref<32x128xbf16, #tpu.memory_space<vmem>>, %arg6: memref<1x128xf32, #tpu.memory_space<vmem>>, %arg7: memref<32x128xbf16, #tpu.memory_space<vmem>>, %arg8: memref<1x128xf32, #tpu.memory_space<vmem>>, %arg9: memref<8x128xf32, #tpu.memory_space<vmem>>) attributes {dimension_semantics = [], scalar_prefetch = 0 : i64, scratch_operands = 0 : i64, tpu.core_type = #tpu.core_type<tc>} {
    %0 = tpu.iota {dimensions = array<i32: 1>} : vector<8x128xi32>
    %c96_i32 = arith.constant 96 : i32
    %1 = vector.broadcast %c96_i32 : i32 to vector<8x128xi32>
    %2 = arith.cmpi sge, %0, %1 : vector<8x128xi32>
    %c0 = arith.constant 0 : index
    %c0_0 = arith.constant 0 : index
    %3 = vector.load %arg0[%c0, %c0_0] : memref<64x4xbf16, #tpu.memory_space<vmem>>, vector<64x4xbf16>
    %c0_1 = arith.constant 0 : index
    %c0_2 = arith.constant 0 : index
    %4 = vector.load %arg1[%c0_1, %c0_2] : memref<4x128xbf16, #tpu.memory_space<vmem>>, vector<4x128xbf16>
    %c0_3 = arith.constant 0 : index
    %c0_4 = arith.constant 0 : index
    %5 = vector.load %arg2[%c0_3, %c0_4] : memref<32x128xbf16, #tpu.memory_space<vmem>>, vector<32x128xbf16>
    %c0_5 = arith.constant 0 : index
    %c0_6 = arith.constant 0 : index
    %6 = vector.load %arg3[%c0_5, %c0_6] : memref<1x128xf32, #tpu.memory_space<vmem>>, vector<1x128xf32>
    %cst = arith.constant dense<0.000000e+00> : vector<64x128xf32>
    %7 = tpu.matmul %3, %4, %cst {dimension_numbers = #tpu.dot_dimension_numbers<[1], [0], [0], [1], [0, 0, 1, 1], [], []>} : vector<64x4xbf16>, vector<4x128xbf16>, vector<64x128xf32> -> vector<64x128xf32>
    %8 = vector.broadcast %6 : vector<1x128xf32> to vector<64x128xf32>
    %9 = arith.addf %7, %8 : vector<64x128xf32>
    %cst_7 = arith.constant 0.000000e+00 : f32
    %10 = vector.broadcast %cst_7 : f32 to vector<8x32xf32>
    %cst_8 = arith.constant 0.000000e+00 : f32
    %11 = vector.broadcast %cst_8 : f32 to vector<8x32xf32>
    %12 = vector.extract_strided_slice %9 {offsets = [0, 0], sizes = [8, 128], strides = [1, 1]} : vector<64x128xf32> to vector<8x128xf32>
    %13 = arith.truncf %10 : vector<8x32xf32> to vector<8x32xbf16>
    %cst_9 = arith.constant dense<0.000000e+00> : vector<8x128xf32>
    %14 = tpu.matmul %13, %5, %cst_9 {dimension_numbers = #tpu.dot_dimension_numbers<[1], [0], [0], [1], [0, 0, 1, 1], [], []>} : vector<8x32xbf16>, vector<32x128xbf16>, vector<8x128xf32> -> vector<8x128xf32>
    %15 = arith.addf %12, %14 : vector<8x128xf32>
    %16 = math.tanh %15 : vector<8x128xf32>
    %17 = arith.negf %15 : vector<8x128xf32>
    %18 = math.exp %17 : vector<8x128xf32>
    %cst_10 = arith.constant 1.000000e+00 : f32
    %19 = vector.broadcast %cst_10 : f32 to vector<8x128xf32>
    %20 = arith.addf %19, %18 : vector<8x128xf32>
    %21 = arith.divf %19, %20 : vector<8x128xf32>
    %22 = arith.select %2, %16, %21 : vector<8x128xi1>, vector<8x128xf32>
    %23 = vector.extract_strided_slice %22 {offsets = [0, 0], sizes = [8, 32], strides = [1, 1]} : vector<8x128xf32> to vector<8x32xf32>
    %24 = vector.extract_strided_slice %22 {offsets = [0, 32], sizes = [8, 32], strides = [1, 1]} : vector<8x128xf32> to vector<8x32xf32>
    %25 = vector.extract_strided_slice %22 {offsets = [0, 64], sizes = [8, 32], strides = [1, 1]} : vector<8x128xf32> to vector<8x32xf32>
    %26 = vector.extract_strided_slice %22 {offsets = [0, 96], sizes = [8, 32], strides = [1, 1]} : vector<8x128xf32> to vector<8x32xf32>
    %27 = arith.mulf %24, %11 : vector<8x32xf32>
    %28 = arith.mulf %23, %26 : vector<8x32xf32>
    %29 = arith.addf %27, %28 : vector<8x32xf32>
    %30 = math.tanh %29 : vector<8x32xf32>
    %31 = arith.mulf %25, %30 : vector<8x32xf32>
    %32 = vector.extract_strided_slice %9 {offsets = [8, 0], sizes = [8, 128], strides = [1, 1]} : vector<64x128xf32> to vector<8x128xf32>
    %33 = arith.truncf %31 : vector<8x32xf32> to vector<8x32xbf16>
    %cst_11 = arith.constant dense<0.000000e+00> : vector<8x128xf32>
    %34 = tpu.matmul %33, %5, %cst_11 {dimension_numbers = #tpu.dot_dimension_numbers<[1], [0], [0], [1], [0, 0, 1, 1], [], []>} : vector<8x32xbf16>, vector<32x128xbf16>, vector<8x128xf32> -> vector<8x128xf32>
    %35 = arith.addf %32, %34 : vector<8x128xf32>
    %36 = math.tanh %35 : vector<8x128xf32>
    %37 = arith.negf %35 : vector<8x128xf32>
    %38 = math.exp %37 : vector<8x128xf32>
    %cst_12 = arith.constant 1.000000e+00 : f32
    %39 = vector.broadcast %cst_12 : f32 to vector<8x128xf32>
    %40 = arith.addf %39, %38 : vector<8x128xf32>
    %41 = arith.divf %39, %40 : vector<8x128xf32>
    %42 = arith.select %2, %36, %41 : vector<8x128xi1>, vector<8x128xf32>
    %43 = vector.extract_strided_slice %42 {offsets = [0, 0], sizes = [8, 32], strides = [1, 1]} : vector<8x128xf32> to vector<8x32xf32>
    %44 = vector.extract_strided_slice %42 {offsets = [0, 32], sizes = [8, 32], strides = [1, 1]} : vector<8x128xf32> to vector<8x32xf32>
    %45 = vector.extract_strided_slice %42 {offsets = [0, 64], sizes = [8, 32], strides = [1, 1]} : vector<8x128xf32> to vector<8x32xf32>
    %46 = vector.extract_strided_slice %42 {offsets = [0, 96], sizes = [8, 32], strides = [1, 1]} : vector<8x128xf32> to vector<8x32xf32>
    %47 = arith.mulf %44, %29 : vector<8x32xf32>
    %48 = arith.mulf %43, %46 : vector<8x32xf32>
    %49 = arith.addf %47, %48 : vector<8x32xf32>
    %50 = math.tanh %49 : vector<8x32xf32>
    %51 = arith.mulf %45, %50 : vector<8x32xf32>
    %52 = vector.extract_strided_slice %9 {offsets = [16, 0], sizes = [8, 128], strides = [1, 1]} : vector<64x128xf32> to vector<8x128xf32>
    %53 = arith.truncf %51 : vector<8x32xf32> to vector<8x32xbf16>
    %cst_13 = arith.constant dense<0.000000e+00> : vector<8x128xf32>
    %54 = tpu.matmul %53, %5, %cst_13 {dimension_numbers = #tpu.dot_dimension_numbers<[1], [0], [0], [1], [0, 0, 1, 1], [], []>} : vector<8x32xbf16>, vector<32x128xbf16>, vector<8x128xf32> -> vector<8x128xf32>
    %55 = arith.addf %52, %54 : vector<8x128xf32>
    %56 = math.tanh %55 : vector<8x128xf32>
    %57 = arith.negf %55 : vector<8x128xf32>
    %58 = math.exp %57 : vector<8x128xf32>
    %cst_14 = arith.constant 1.000000e+00 : f32
    %59 = vector.broadcast %cst_14 : f32 to vector<8x128xf32>
    %60 = arith.addf %59, %58 : vector<8x128xf32>
    %61 = arith.divf %59, %60 : vector<8x128xf32>
    %62 = arith.select %2, %56, %61 : vector<8x128xi1>, vector<8x128xf32>
    %63 = vector.extract_strided_slice %62 {offsets = [0, 0], sizes = [8, 32], strides = [1, 1]} : vector<8x128xf32> to vector<8x32xf32>
    %64 = vector.extract_strided_slice %62 {offsets = [0, 32], sizes = [8, 32], strides = [1, 1]} : vector<8x128xf32> to vector<8x32xf32>
    %65 = vector.extract_strided_slice %62 {offsets = [0, 64], sizes = [8, 32], strides = [1, 1]} : vector<8x128xf32> to vector<8x32xf32>
    %66 = vector.extract_strided_slice %62 {offsets = [0, 96], sizes = [8, 32], strides = [1, 1]} : vector<8x128xf32> to vector<8x32xf32>
    %67 = arith.mulf %64, %49 : vector<8x32xf32>
    %68 = arith.mulf %63, %66 : vector<8x32xf32>
    %69 = arith.addf %67, %68 : vector<8x32xf32>
    %70 = math.tanh %69 : vector<8x32xf32>
    %71 = arith.mulf %65, %70 : vector<8x32xf32>
    %72 = vector.extract_strided_slice %9 {offsets = [24, 0], sizes = [8, 128], strides = [1, 1]} : vector<64x128xf32> to vector<8x128xf32>
    %73 = arith.truncf %71 : vector<8x32xf32> to vector<8x32xbf16>
    %cst_15 = arith.constant dense<0.000000e+00> : vector<8x128xf32>
    %74 = tpu.matmul %73, %5, %cst_15 {dimension_numbers = #tpu.dot_dimension_numbers<[1], [0], [0], [1], [0, 0, 1, 1], [], []>} : vector<8x32xbf16>, vector<32x128xbf16>, vector<8x128xf32> -> vector<8x128xf32>
    %75 = arith.addf %72, %74 : vector<8x128xf32>
    %76 = math.tanh %75 : vector<8x128xf32>
    %77 = arith.negf %75 : vector<8x128xf32>
    %78 = math.exp %77 : vector<8x128xf32>
    %cst_16 = arith.constant 1.000000e+00 : f32
    %79 = vector.broadcast %cst_16 : f32 to vector<8x128xf32>
    %80 = arith.addf %79, %78 : vector<8x128xf32>
    %81 = arith.divf %79, %80 : vector<8x128xf32>
    %82 = arith.select %2, %76, %81 : vector<8x128xi1>, vector<8x128xf32>
    %83 = vector.extract_strided_slice %82 {offsets = [0, 0], sizes = [8, 32], strides = [1, 1]} : vector<8x128xf32> to vector<8x32xf32>
    %84 = vector.extract_strided_slice %82 {offsets = [0, 32], sizes = [8, 32], strides = [1, 1]} : vector<8x128xf32> to vector<8x32xf32>
    %85 = vector.extract_strided_slice %82 {offsets = [0, 64], sizes = [8, 32], strides = [1, 1]} : vector<8x128xf32> to vector<8x32xf32>
    %86 = vector.extract_strided_slice %82 {offsets = [0, 96], sizes = [8, 32], strides = [1, 1]} : vector<8x128xf32> to vector<8x32xf32>
    %87 = arith.mulf %84, %69 : vector<8x32xf32>
    %88 = arith.mulf %83, %86 : vector<8x32xf32>
    %89 = arith.addf %87, %88 : vector<8x32xf32>
    %90 = math.tanh %89 : vector<8x32xf32>
    %91 = arith.mulf %85, %90 : vector<8x32xf32>
    %92 = vector.extract_strided_slice %9 {offsets = [32, 0], sizes = [8, 128], strides = [1, 1]} : vector<64x128xf32> to vector<8x128xf32>
    %93 = arith.truncf %91 : vector<8x32xf32> to vector<8x32xbf16>
    %cst_17 = arith.constant dense<0.000000e+00> : vector<8x128xf32>
    %94 = tpu.matmul %93, %5, %cst_17 {dimension_numbers = #tpu.dot_dimension_numbers<[1], [0], [0], [1], [0, 0, 1, 1], [], []>} : vector<8x32xbf16>, vector<32x128xbf16>, vector<8x128xf32> -> vector<8x128xf32>
    %95 = arith.addf %92, %94 : vector<8x128xf32>
    %96 = math.tanh %95 : vector<8x128xf32>
    %97 = arith.negf %95 : vector<8x128xf32>
    %98 = math.exp %97 : vector<8x128xf32>
    %cst_18 = arith.constant 1.000000e+00 : f32
    %99 = vector.broadcast %cst_18 : f32 to vector<8x128xf32>
    %100 = arith.addf %99, %98 : vector<8x128xf32>
    %101 = arith.divf %99, %100 : vector<8x128xf32>
    %102 = arith.select %2, %96, %101 : vector<8x128xi1>, vector<8x128xf32>
    %103 = vector.extract_strided_slice %102 {offsets = [0, 0], sizes = [8, 32], strides = [1, 1]} : vector<8x128xf32> to vector<8x32xf32>
    %104 = vector.extract_strided_slice %102 {offsets = [0, 32], sizes = [8, 32], strides = [1, 1]} : vector<8x128xf32> to vector<8x32xf32>
    %105 = vector.extract_strided_slice %102 {offsets = [0, 64], sizes = [8, 32], strides = [1, 1]} : vector<8x128xf32> to vector<8x32xf32>
    %106 = vector.extract_strided_slice %102 {offsets = [0, 96], sizes = [8, 32], strides = [1, 1]} : vector<8x128xf32> to vector<8x32xf32>
    %107 = arith.mulf %104, %89 : vector<8x32xf32>
    %108 = arith.mulf %103, %106 : vector<8x32xf32>
    %109 = arith.addf %107, %108 : vector<8x32xf32>
    %110 = math.tanh %109 : vector<8x32xf32>
    %111 = arith.mulf %105, %110 : vector<8x32xf32>
    %112 = vector.extract_strided_slice %9 {offsets = [40, 0], sizes = [8, 128], strides = [1, 1]} : vector<64x128xf32> to vector<8x128xf32>
    %113 = arith.truncf %111 : vector<8x32xf32> to vector<8x32xbf16>
    %cst_19 = arith.constant dense<0.000000e+00> : vector<8x128xf32>
    %114 = tpu.matmul %113, %5, %cst_19 {dimension_numbers = #tpu.dot_dimension_numbers<[1], [0], [0], [1], [0, 0, 1, 1], [], []>} : vector<8x32xbf16>, vector<32x128xbf16>, vector<8x128xf32> -> vector<8x128xf32>
    %115 = arith.addf %112, %114 : vector<8x128xf32>
    %116 = math.tanh %115 : vector<8x128xf32>
    %117 = arith.negf %115 : vector<8x128xf32>
    %118 = math.exp %117 : vector<8x128xf32>
    %cst_20 = arith.constant 1.000000e+00 : f32
    %119 = vector.broadcast %cst_20 : f32 to vector<8x128xf32>
    %120 = arith.addf %119, %118 : vector<8x128xf32>
    %121 = arith.divf %119, %120 : vector<8x128xf32>
    %122 = arith.select %2, %116, %121 : vector<8x128xi1>, vector<8x128xf32>
    %123 = vector.extract_strided_slice %122 {offsets = [0, 0], sizes = [8, 32], strides = [1, 1]} : vector<8x128xf32> to vector<8x32xf32>
    %124 = vector.extract_strided_slice %122 {offsets = [0, 32], sizes = [8, 32], strides = [1, 1]} : vector<8x128xf32> to vector<8x32xf32>
    %125 = vector.extract_strided_slice %122 {offsets = [0, 64], sizes = [8, 32], strides = [1, 1]} : vector<8x128xf32> to vector<8x32xf32>
    %126 = vector.extract_strided_slice %122 {offsets = [0, 96], sizes = [8, 32], strides = [1, 1]} : vector<8x128xf32> to vector<8x32xf32>
    %127 = arith.mulf %124, %109 : vector<8x32xf32>
    %128 = arith.mulf %123, %126 : vector<8x32xf32>
    %129 = arith.addf %127, %128 : vector<8x32xf32>
    %130 = math.tanh %129 : vector<8x32xf32>
    %131 = arith.mulf %125, %130 : vector<8x32xf32>
    %132 = vector.extract_strided_slice %9 {offsets = [48, 0], sizes = [8, 128], strides = [1, 1]} : vector<64x128xf32> to vector<8x128xf32>
    %133 = arith.truncf %131 : vector<8x32xf32> to vector<8x32xbf16>
    %cst_21 = arith.constant dense<0.000000e+00> : vector<8x128xf32>
    %134 = tpu.matmul %133, %5, %cst_21 {dimension_numbers = #tpu.dot_dimension_numbers<[1], [0], [0], [1], [0, 0, 1, 1], [], []>} : vector<8x32xbf16>, vector<32x128xbf16>, vector<8x128xf32> -> vector<8x128xf32>
    %135 = arith.addf %132, %134 : vector<8x128xf32>
    %136 = math.tanh %135 : vector<8x128xf32>
    %137 = arith.negf %135 : vector<8x128xf32>
    %138 = math.exp %137 : vector<8x128xf32>
    %cst_22 = arith.constant 1.000000e+00 : f32
    %139 = vector.broadcast %cst_22 : f32 to vector<8x128xf32>
    %140 = arith.addf %139, %138 : vector<8x128xf32>
    %141 = arith.divf %139, %140 : vector<8x128xf32>
    %142 = arith.select %2, %136, %141 : vector<8x128xi1>, vector<8x128xf32>
    %143 = vector.extract_strided_slice %142 {offsets = [0, 0], sizes = [8, 32], strides = [1, 1]} : vector<8x128xf32> to vector<8x32xf32>
    %144 = vector.extract_strided_slice %142 {offsets = [0, 32], sizes = [8, 32], strides = [1, 1]} : vector<8x128xf32> to vector<8x32xf32>
    %145 = vector.extract_strided_slice %142 {offsets = [0, 64], sizes = [8, 32], strides = [1, 1]} : vector<8x128xf32> to vector<8x32xf32>
    %146 = vector.extract_strided_slice %142 {offsets = [0, 96], sizes = [8, 32], strides = [1, 1]} : vector<8x128xf32> to vector<8x32xf32>
    %147 = arith.mulf %144, %129 : vector<8x32xf32>
    %148 = arith.mulf %143, %146 : vector<8x32xf32>
    %149 = arith.addf %147, %148 : vector<8x32xf32>
    %150 = math.tanh %149 : vector<8x32xf32>
    %151 = arith.mulf %145, %150 : vector<8x32xf32>
    %152 = vector.extract_strided_slice %9 {offsets = [56, 0], sizes = [8, 128], strides = [1, 1]} : vector<64x128xf32> to vector<8x128xf32>
    %153 = arith.truncf %151 : vector<8x32xf32> to vector<8x32xbf16>
    %cst_23 = arith.constant dense<0.000000e+00> : vector<8x128xf32>
    %154 = tpu.matmul %153, %5, %cst_23 {dimension_numbers = #tpu.dot_dimension_numbers<[1], [0], [0], [1], [0, 0, 1, 1], [], []>} : vector<8x32xbf16>, vector<32x128xbf16>, vector<8x128xf32> -> vector<8x128xf32>
    %155 = arith.addf %152, %154 : vector<8x128xf32>
    %156 = math.tanh %155 : vector<8x128xf32>
    %157 = arith.negf %155 : vector<8x128xf32>
    %158 = math.exp %157 : vector<8x128xf32>
    %cst_24 = arith.constant 1.000000e+00 : f32
    %159 = vector.broadcast %cst_24 : f32 to vector<8x128xf32>
    %160 = arith.addf %159, %158 : vector<8x128xf32>
    %161 = arith.divf %159, %160 : vector<8x128xf32>
    %162 = arith.select %2, %156, %161 : vector<8x128xi1>, vector<8x128xf32>
    %163 = vector.extract_strided_slice %162 {offsets = [0, 0], sizes = [8, 32], strides = [1, 1]} : vector<8x128xf32> to vector<8x32xf32>
    %164 = vector.extract_strided_slice %162 {offsets = [0, 32], sizes = [8, 32], strides = [1, 1]} : vector<8x128xf32> to vector<8x32xf32>
    %165 = vector.extract_strided_slice %162 {offsets = [0, 64], sizes = [8, 32], strides = [1, 1]} : vector<8x128xf32> to vector<8x32xf32>
    %166 = vector.extract_strided_slice %162 {offsets = [0, 96], sizes = [8, 32], strides = [1, 1]} : vector<8x128xf32> to vector<8x32xf32>
    %167 = arith.mulf %164, %149 : vector<8x32xf32>
    %168 = arith.mulf %163, %166 : vector<8x32xf32>
    %169 = arith.addf %167, %168 : vector<8x32xf32>
    %170 = math.tanh %169 : vector<8x32xf32>
    %171 = arith.mulf %165, %170 : vector<8x32xf32>
    %172 = tpu.concatenate %31, %51, %71, %91, %111, %131, %151, %171 in 0 : vector<8x32xf32>, vector<8x32xf32>, vector<8x32xf32>, vector<8x32xf32>, vector<8x32xf32>, vector<8x32xf32>, vector<8x32xf32>, vector<8x32xf32> -> vector<64x32xf32>
    %173 = arith.truncf %172 : vector<64x32xf32> to vector<64x32xbf16>
    %c0_25 = arith.constant 0 : index
    %c0_26 = arith.constant 0 : index
    %174 = vector.load %arg4[%c0_25, %c0_26] : memref<32x128xbf16, #tpu.memory_space<vmem>>, vector<32x128xbf16>
    %c0_27 = arith.constant 0 : index
    %c0_28 = arith.constant 0 : index
    %175 = vector.load %arg5[%c0_27, %c0_28] : memref<32x128xbf16, #tpu.memory_space<vmem>>, vector<32x128xbf16>
    %c0_29 = arith.constant 0 : index
    %c0_30 = arith.constant 0 : index
    %176 = vector.load %arg6[%c0_29, %c0_30] : memref<1x128xf32, #tpu.memory_space<vmem>>, vector<1x128xf32>
    %cst_31 = arith.constant dense<0.000000e+00> : vector<64x128xf32>
    %177 = tpu.matmul %173, %174, %cst_31 {dimension_numbers = #tpu.dot_dimension_numbers<[1], [0], [0], [1], [0, 0, 1, 1], [], []>} : vector<64x32xbf16>, vector<32x128xbf16>, vector<64x128xf32> -> vector<64x128xf32>
    %178 = vector.broadcast %176 : vector<1x128xf32> to vector<64x128xf32>
    %179 = arith.addf %177, %178 : vector<64x128xf32>
    %cst_32 = arith.constant 0.000000e+00 : f32
    %180 = vector.broadcast %cst_32 : f32 to vector<8x32xf32>
    %cst_33 = arith.constant 0.000000e+00 : f32
    %181 = vector.broadcast %cst_33 : f32 to vector<8x32xf32>
    %182 = vector.extract_strided_slice %179 {offsets = [0, 0], sizes = [8, 128], strides = [1, 1]} : vector<64x128xf32> to vector<8x128xf32>
    %183 = arith.truncf %180 : vector<8x32xf32> to vector<8x32xbf16>
    %cst_34 = arith.constant dense<0.000000e+00> : vector<8x128xf32>
    %184 = tpu.matmul %183, %175, %cst_34 {dimension_numbers = #tpu.dot_dimension_numbers<[1], [0], [0], [1], [0, 0, 1, 1], [], []>} : vector<8x32xbf16>, vector<32x128xbf16>, vector<8x128xf32> -> vector<8x128xf32>
    %185 = arith.addf %182, %184 : vector<8x128xf32>
    %186 = math.tanh %185 : vector<8x128xf32>
    %187 = arith.negf %185 : vector<8x128xf32>
    %188 = math.exp %187 : vector<8x128xf32>
    %cst_35 = arith.constant 1.000000e+00 : f32
    %189 = vector.broadcast %cst_35 : f32 to vector<8x128xf32>
    %190 = arith.addf %189, %188 : vector<8x128xf32>
    %191 = arith.divf %189, %190 : vector<8x128xf32>
    %192 = arith.select %2, %186, %191 : vector<8x128xi1>, vector<8x128xf32>
    %193 = vector.extract_strided_slice %192 {offsets = [0, 0], sizes = [8, 32], strides = [1, 1]} : vector<8x128xf32> to vector<8x32xf32>
    %194 = vector.extract_strided_slice %192 {offsets = [0, 32], sizes = [8, 32], strides = [1, 1]} : vector<8x128xf32> to vector<8x32xf32>
    %195 = vector.extract_strided_slice %192 {offsets = [0, 64], sizes = [8, 32], strides = [1, 1]} : vector<8x128xf32> to vector<8x32xf32>
    %196 = vector.extract_strided_slice %192 {offsets = [0, 96], sizes = [8, 32], strides = [1, 1]} : vector<8x128xf32> to vector<8x32xf32>
    %197 = arith.mulf %194, %181 : vector<8x32xf32>
    %198 = arith.mulf %193, %196 : vector<8x32xf32>
    %199 = arith.addf %197, %198 : vector<8x32xf32>
    %200 = math.tanh %199 : vector<8x32xf32>
    %201 = arith.mulf %195, %200 : vector<8x32xf32>
    %202 = vector.extract_strided_slice %179 {offsets = [8, 0], sizes = [8, 128], strides = [1, 1]} : vector<64x128xf32> to vector<8x128xf32>
    %203 = arith.truncf %201 : vector<8x32xf32> to vector<8x32xbf16>
    %cst_36 = arith.constant dense<0.000000e+00> : vector<8x128xf32>
    %204 = tpu.matmul %203, %175, %cst_36 {dimension_numbers = #tpu.dot_dimension_numbers<[1], [0], [0], [1], [0, 0, 1, 1], [], []>} : vector<8x32xbf16>, vector<32x128xbf16>, vector<8x128xf32> -> vector<8x128xf32>
    %205 = arith.addf %202, %204 : vector<8x128xf32>
    %206 = math.tanh %205 : vector<8x128xf32>
    %207 = arith.negf %205 : vector<8x128xf32>
    %208 = math.exp %207 : vector<8x128xf32>
    %cst_37 = arith.constant 1.000000e+00 : f32
    %209 = vector.broadcast %cst_37 : f32 to vector<8x128xf32>
    %210 = arith.addf %209, %208 : vector<8x128xf32>
    %211 = arith.divf %209, %210 : vector<8x128xf32>
    %212 = arith.select %2, %206, %211 : vector<8x128xi1>, vector<8x128xf32>
    %213 = vector.extract_strided_slice %212 {offsets = [0, 0], sizes = [8, 32], strides = [1, 1]} : vector<8x128xf32> to vector<8x32xf32>
    %214 = vector.extract_strided_slice %212 {offsets = [0, 32], sizes = [8, 32], strides = [1, 1]} : vector<8x128xf32> to vector<8x32xf32>
    %215 = vector.extract_strided_slice %212 {offsets = [0, 64], sizes = [8, 32], strides = [1, 1]} : vector<8x128xf32> to vector<8x32xf32>
    %216 = vector.extract_strided_slice %212 {offsets = [0, 96], sizes = [8, 32], strides = [1, 1]} : vector<8x128xf32> to vector<8x32xf32>
    %217 = arith.mulf %214, %199 : vector<8x32xf32>
    %218 = arith.mulf %213, %216 : vector<8x32xf32>
    %219 = arith.addf %217, %218 : vector<8x32xf32>
    %220 = math.tanh %219 : vector<8x32xf32>
    %221 = arith.mulf %215, %220 : vector<8x32xf32>
    %222 = vector.extract_strided_slice %179 {offsets = [16, 0], sizes = [8, 128], strides = [1, 1]} : vector<64x128xf32> to vector<8x128xf32>
    %223 = arith.truncf %221 : vector<8x32xf32> to vector<8x32xbf16>
    %cst_38 = arith.constant dense<0.000000e+00> : vector<8x128xf32>
    %224 = tpu.matmul %223, %175, %cst_38 {dimension_numbers = #tpu.dot_dimension_numbers<[1], [0], [0], [1], [0, 0, 1, 1], [], []>} : vector<8x32xbf16>, vector<32x128xbf16>, vector<8x128xf32> -> vector<8x128xf32>
    %225 = arith.addf %222, %224 : vector<8x128xf32>
    %226 = math.tanh %225 : vector<8x128xf32>
    %227 = arith.negf %225 : vector<8x128xf32>
    %228 = math.exp %227 : vector<8x128xf32>
    %cst_39 = arith.constant 1.000000e+00 : f32
    %229 = vector.broadcast %cst_39 : f32 to vector<8x128xf32>
    %230 = arith.addf %229, %228 : vector<8x128xf32>
    %231 = arith.divf %229, %230 : vector<8x128xf32>
    %232 = arith.select %2, %226, %231 : vector<8x128xi1>, vector<8x128xf32>
    %233 = vector.extract_strided_slice %232 {offsets = [0, 0], sizes = [8, 32], strides = [1, 1]} : vector<8x128xf32> to vector<8x32xf32>
    %234 = vector.extract_strided_slice %232 {offsets = [0, 32], sizes = [8, 32], strides = [1, 1]} : vector<8x128xf32> to vector<8x32xf32>
    %235 = vector.extract_strided_slice %232 {offsets = [0, 64], sizes = [8, 32], strides = [1, 1]} : vector<8x128xf32> to vector<8x32xf32>
    %236 = vector.extract_strided_slice %232 {offsets = [0, 96], sizes = [8, 32], strides = [1, 1]} : vector<8x128xf32> to vector<8x32xf32>
    %237 = arith.mulf %234, %219 : vector<8x32xf32>
    %238 = arith.mulf %233, %236 : vector<8x32xf32>
    %239 = arith.addf %237, %238 : vector<8x32xf32>
    %240 = math.tanh %239 : vector<8x32xf32>
    %241 = arith.mulf %235, %240 : vector<8x32xf32>
    %242 = vector.extract_strided_slice %179 {offsets = [24, 0], sizes = [8, 128], strides = [1, 1]} : vector<64x128xf32> to vector<8x128xf32>
    %243 = arith.truncf %241 : vector<8x32xf32> to vector<8x32xbf16>
    %cst_40 = arith.constant dense<0.000000e+00> : vector<8x128xf32>
    %244 = tpu.matmul %243, %175, %cst_40 {dimension_numbers = #tpu.dot_dimension_numbers<[1], [0], [0], [1], [0, 0, 1, 1], [], []>} : vector<8x32xbf16>, vector<32x128xbf16>, vector<8x128xf32> -> vector<8x128xf32>
    %245 = arith.addf %242, %244 : vector<8x128xf32>
    %246 = math.tanh %245 : vector<8x128xf32>
    %247 = arith.negf %245 : vector<8x128xf32>
    %248 = math.exp %247 : vector<8x128xf32>
    %cst_41 = arith.constant 1.000000e+00 : f32
    %249 = vector.broadcast %cst_41 : f32 to vector<8x128xf32>
    %250 = arith.addf %249, %248 : vector<8x128xf32>
    %251 = arith.divf %249, %250 : vector<8x128xf32>
    %252 = arith.select %2, %246, %251 : vector<8x128xi1>, vector<8x128xf32>
    %253 = vector.extract_strided_slice %252 {offsets = [0, 0], sizes = [8, 32], strides = [1, 1]} : vector<8x128xf32> to vector<8x32xf32>
    %254 = vector.extract_strided_slice %252 {offsets = [0, 32], sizes = [8, 32], strides = [1, 1]} : vector<8x128xf32> to vector<8x32xf32>
    %255 = vector.extract_strided_slice %252 {offsets = [0, 64], sizes = [8, 32], strides = [1, 1]} : vector<8x128xf32> to vector<8x32xf32>
    %256 = vector.extract_strided_slice %252 {offsets = [0, 96], sizes = [8, 32], strides = [1, 1]} : vector<8x128xf32> to vector<8x32xf32>
    %257 = arith.mulf %254, %239 : vector<8x32xf32>
    %258 = arith.mulf %253, %256 : vector<8x32xf32>
    %259 = arith.addf %257, %258 : vector<8x32xf32>
    %260 = math.tanh %259 : vector<8x32xf32>
    %261 = arith.mulf %255, %260 : vector<8x32xf32>
    %262 = vector.extract_strided_slice %179 {offsets = [32, 0], sizes = [8, 128], strides = [1, 1]} : vector<64x128xf32> to vector<8x128xf32>
    %263 = arith.truncf %261 : vector<8x32xf32> to vector<8x32xbf16>
    %cst_42 = arith.constant dense<0.000000e+00> : vector<8x128xf32>
    %264 = tpu.matmul %263, %175, %cst_42 {dimension_numbers = #tpu.dot_dimension_numbers<[1], [0], [0], [1], [0, 0, 1, 1], [], []>} : vector<8x32xbf16>, vector<32x128xbf16>, vector<8x128xf32> -> vector<8x128xf32>
    %265 = arith.addf %262, %264 : vector<8x128xf32>
    %266 = math.tanh %265 : vector<8x128xf32>
    %267 = arith.negf %265 : vector<8x128xf32>
    %268 = math.exp %267 : vector<8x128xf32>
    %cst_43 = arith.constant 1.000000e+00 : f32
    %269 = vector.broadcast %cst_43 : f32 to vector<8x128xf32>
    %270 = arith.addf %269, %268 : vector<8x128xf32>
    %271 = arith.divf %269, %270 : vector<8x128xf32>
    %272 = arith.select %2, %266, %271 : vector<8x128xi1>, vector<8x128xf32>
    %273 = vector.extract_strided_slice %272 {offsets = [0, 0], sizes = [8, 32], strides = [1, 1]} : vector<8x128xf32> to vector<8x32xf32>
    %274 = vector.extract_strided_slice %272 {offsets = [0, 32], sizes = [8, 32], strides = [1, 1]} : vector<8x128xf32> to vector<8x32xf32>
    %275 = vector.extract_strided_slice %272 {offsets = [0, 64], sizes = [8, 32], strides = [1, 1]} : vector<8x128xf32> to vector<8x32xf32>
    %276 = vector.extract_strided_slice %272 {offsets = [0, 96], sizes = [8, 32], strides = [1, 1]} : vector<8x128xf32> to vector<8x32xf32>
    %277 = arith.mulf %274, %259 : vector<8x32xf32>
    %278 = arith.mulf %273, %276 : vector<8x32xf32>
    %279 = arith.addf %277, %278 : vector<8x32xf32>
    %280 = math.tanh %279 : vector<8x32xf32>
    %281 = arith.mulf %275, %280 : vector<8x32xf32>
    %282 = vector.extract_strided_slice %179 {offsets = [40, 0], sizes = [8, 128], strides = [1, 1]} : vector<64x128xf32> to vector<8x128xf32>
    %283 = arith.truncf %281 : vector<8x32xf32> to vector<8x32xbf16>
    %cst_44 = arith.constant dense<0.000000e+00> : vector<8x128xf32>
    %284 = tpu.matmul %283, %175, %cst_44 {dimension_numbers = #tpu.dot_dimension_numbers<[1], [0], [0], [1], [0, 0, 1, 1], [], []>} : vector<8x32xbf16>, vector<32x128xbf16>, vector<8x128xf32> -> vector<8x128xf32>
    %285 = arith.addf %282, %284 : vector<8x128xf32>
    %286 = math.tanh %285 : vector<8x128xf32>
    %287 = arith.negf %285 : vector<8x128xf32>
    %288 = math.exp %287 : vector<8x128xf32>
    %cst_45 = arith.constant 1.000000e+00 : f32
    %289 = vector.broadcast %cst_45 : f32 to vector<8x128xf32>
    %290 = arith.addf %289, %288 : vector<8x128xf32>
    %291 = arith.divf %289, %290 : vector<8x128xf32>
    %292 = arith.select %2, %286, %291 : vector<8x128xi1>, vector<8x128xf32>
    %293 = vector.extract_strided_slice %292 {offsets = [0, 0], sizes = [8, 32], strides = [1, 1]} : vector<8x128xf32> to vector<8x32xf32>
    %294 = vector.extract_strided_slice %292 {offsets = [0, 32], sizes = [8, 32], strides = [1, 1]} : vector<8x128xf32> to vector<8x32xf32>
    %295 = vector.extract_strided_slice %292 {offsets = [0, 64], sizes = [8, 32], strides = [1, 1]} : vector<8x128xf32> to vector<8x32xf32>
    %296 = vector.extract_strided_slice %292 {offsets = [0, 96], sizes = [8, 32], strides = [1, 1]} : vector<8x128xf32> to vector<8x32xf32>
    %297 = arith.mulf %294, %279 : vector<8x32xf32>
    %298 = arith.mulf %293, %296 : vector<8x32xf32>
    %299 = arith.addf %297, %298 : vector<8x32xf32>
    %300 = math.tanh %299 : vector<8x32xf32>
    %301 = arith.mulf %295, %300 : vector<8x32xf32>
    %302 = vector.extract_strided_slice %179 {offsets = [48, 0], sizes = [8, 128], strides = [1, 1]} : vector<64x128xf32> to vector<8x128xf32>
    %303 = arith.truncf %301 : vector<8x32xf32> to vector<8x32xbf16>
    %cst_46 = arith.constant dense<0.000000e+00> : vector<8x128xf32>
    %304 = tpu.matmul %303, %175, %cst_46 {dimension_numbers = #tpu.dot_dimension_numbers<[1], [0], [0], [1], [0, 0, 1, 1], [], []>} : vector<8x32xbf16>, vector<32x128xbf16>, vector<8x128xf32> -> vector<8x128xf32>
    %305 = arith.addf %302, %304 : vector<8x128xf32>
    %306 = math.tanh %305 : vector<8x128xf32>
    %307 = arith.negf %305 : vector<8x128xf32>
    %308 = math.exp %307 : vector<8x128xf32>
    %cst_47 = arith.constant 1.000000e+00 : f32
    %309 = vector.broadcast %cst_47 : f32 to vector<8x128xf32>
    %310 = arith.addf %309, %308 : vector<8x128xf32>
    %311 = arith.divf %309, %310 : vector<8x128xf32>
    %312 = arith.select %2, %306, %311 : vector<8x128xi1>, vector<8x128xf32>
    %313 = vector.extract_strided_slice %312 {offsets = [0, 0], sizes = [8, 32], strides = [1, 1]} : vector<8x128xf32> to vector<8x32xf32>
    %314 = vector.extract_strided_slice %312 {offsets = [0, 32], sizes = [8, 32], strides = [1, 1]} : vector<8x128xf32> to vector<8x32xf32>
    %315 = vector.extract_strided_slice %312 {offsets = [0, 64], sizes = [8, 32], strides = [1, 1]} : vector<8x128xf32> to vector<8x32xf32>
    %316 = vector.extract_strided_slice %312 {offsets = [0, 96], sizes = [8, 32], strides = [1, 1]} : vector<8x128xf32> to vector<8x32xf32>
    %317 = arith.mulf %314, %299 : vector<8x32xf32>
    %318 = arith.mulf %313, %316 : vector<8x32xf32>
    %319 = arith.addf %317, %318 : vector<8x32xf32>
    %320 = math.tanh %319 : vector<8x32xf32>
    %321 = arith.mulf %315, %320 : vector<8x32xf32>
    %322 = vector.extract_strided_slice %179 {offsets = [56, 0], sizes = [8, 128], strides = [1, 1]} : vector<64x128xf32> to vector<8x128xf32>
    %323 = arith.truncf %321 : vector<8x32xf32> to vector<8x32xbf16>
    %cst_48 = arith.constant dense<0.000000e+00> : vector<8x128xf32>
    %324 = tpu.matmul %323, %175, %cst_48 {dimension_numbers = #tpu.dot_dimension_numbers<[1], [0], [0], [1], [0, 0, 1, 1], [], []>} : vector<8x32xbf16>, vector<32x128xbf16>, vector<8x128xf32> -> vector<8x128xf32>
    %325 = arith.addf %322, %324 : vector<8x128xf32>
    %326 = math.tanh %325 : vector<8x128xf32>
    %327 = arith.negf %325 : vector<8x128xf32>
    %328 = math.exp %327 : vector<8x128xf32>
    %cst_49 = arith.constant 1.000000e+00 : f32
    %329 = vector.broadcast %cst_49 : f32 to vector<8x128xf32>
    %330 = arith.addf %329, %328 : vector<8x128xf32>
    %331 = arith.divf %329, %330 : vector<8x128xf32>
    %332 = arith.select %2, %326, %331 : vector<8x128xi1>, vector<8x128xf32>
    %333 = vector.extract_strided_slice %332 {offsets = [0, 0], sizes = [8, 32], strides = [1, 1]} : vector<8x128xf32> to vector<8x32xf32>
    %334 = vector.extract_strided_slice %332 {offsets = [0, 32], sizes = [8, 32], strides = [1, 1]} : vector<8x128xf32> to vector<8x32xf32>
    %335 = vector.extract_strided_slice %332 {offsets = [0, 64], sizes = [8, 32], strides = [1, 1]} : vector<8x128xf32> to vector<8x32xf32>
    %336 = vector.extract_strided_slice %332 {offsets = [0, 96], sizes = [8, 32], strides = [1, 1]} : vector<8x128xf32> to vector<8x32xf32>
    %337 = arith.mulf %334, %319 : vector<8x32xf32>
    %338 = arith.mulf %333, %336 : vector<8x32xf32>
    %339 = arith.addf %337, %338 : vector<8x32xf32>
    %340 = math.tanh %339 : vector<8x32xf32>
    %341 = arith.mulf %335, %340 : vector<8x32xf32>
    %342 = arith.truncf %341 : vector<8x32xf32> to vector<8x32xbf16>
    %c0_50 = arith.constant 0 : index
    %c0_51 = arith.constant 0 : index
    %343 = vector.load %arg7[%c0_50, %c0_51] : memref<32x128xbf16, #tpu.memory_space<vmem>>, vector<32x128xbf16>
    %cst_52 = arith.constant dense<0.000000e+00> : vector<8x128xf32>
    %344 = tpu.matmul %342, %343, %cst_52 {dimension_numbers = #tpu.dot_dimension_numbers<[1], [0], [0], [1], [0, 0, 1, 1], [], []>} : vector<8x32xbf16>, vector<32x128xbf16>, vector<8x128xf32> -> vector<8x128xf32>
    %c0_53 = arith.constant 0 : index
    %c0_54 = arith.constant 0 : index
    %345 = vector.load %arg8[%c0_53, %c0_54] : memref<1x128xf32, #tpu.memory_space<vmem>>, vector<1x128xf32>
    %346 = vector.broadcast %345 : vector<1x128xf32> to vector<8x128xf32>
    %347 = arith.addf %344, %346 : vector<8x128xf32>
    %c0_55 = arith.constant 0 : index
    %c0_56 = arith.constant 0 : index
    %348 = vector.load %arg9[%c0_55, %c0_56] : memref<8x128xf32, #tpu.memory_space<vmem>>, vector<8x128xf32>
    tpu.vector_store %arg9[%c0_55, %c0_56], %347 {strides = array<i32>} : memref<8x128xf32, #tpu.memory_space<vmem>>, vector<8x128xf32>,
    return
  }
}

</mosaic_0001>

<llo_original>
// kernel: tpu_custom_call.1
$region0: #{tpu_custom_call.1}
  #allocation0 [shape = 'u32[]', space=smem, size = 0x4, offset = 0x4, fixed_abs, tag = 'smem constant byte address 0x4 - core index']
  #allocation1 [shape = 'u32[144,128]{1,0:T(1,128)}', space=vmem, size = 0x12000, scoped, tag = 'internal scratch']
  %s0 = inlined_call_operand.vmem [shape: bf16[64,4], index: 0, kind: input, shape index: {}]
  %s1 = inlined_call_operand.vmem [shape: bf16[4,128], index: 1, kind: input, shape index: {}]
  %s2 = inlined_call_operand.vmem [shape: bf16[32,128], index: 2, kind: input, shape index: {}]
  %s3 = inlined_call_operand.vmem [shape: f32[1,128], index: 3, kind: input, shape index: {}]
  %s4 = inlined_call_operand.vmem [shape: bf16[32,128], index: 4, kind: input, shape index: {}]
  %s5 = inlined_call_operand.hbm [shape: bf16[32,128], index: 5, kind: input, shape index: {}]
  %s6 = inlined_call_operand.vmem [shape: f32[1,128], index: 6, kind: input, shape index: {}]
  %s7 = inlined_call_operand.hbm [shape: bf16[32,128], index: 7, kind: input, shape index: {}]
  %s8 = inlined_call_operand.vmem [shape: f32[1,128], index: 8, kind: input, shape index: {}]
  %s9 = inlined_call_operand.hbm [shape: f32[8,128], index: 9, kind: output, shape index: {}]
  %s10 = sld [smem:[#allocation0]]
  $region54: #{tpu_custom_call.1} parent=0
    _
  %s12 = ssub.s32 1, %s10
  %s13 = scalar_select 0, %s12, %s10
  $region1: #{tpu_custom_call.1} parent=0
    #allocation2 [shape = 'u8[8192]{0}', space=vmem, size = 0x2000, scoped, tag = 'input window, operand 5, single buffered']
    #allocation3 [shape = 's32[1]{0}', space=sflag, size = 0x4, scoped, tag = 'scoped memory for tpu_custom_call.1']
    #allocation4 [shape = 's32[1]{0}', space=sflag, size = 0x4, scoped, tag = 'scoped memory for tpu_custom_call.1']
    #allocation5 [shape = 'u8[8192]{0}', space=vmem, size = 0x2000, scoped, tag = 'input window, operand 7, single buffered']
    #allocation6 [shape = 's32[1]{0}', space=sflag, size = 0x4, scoped, tag = 'scoped memory for tpu_custom_call.1']
    #allocation7 [shape = 'u8[4096]{0}', space=vmem, size = 0x1000, scoped, tag = 'output window, operand 0, single buffered']
    %14 = vsyncpa [#allocation3], 0
    %15 = vsyncpa [#allocation6], 0
    %16 = vsyncpa [#allocation4], 0
    // Predicated region
    $region2: #{tpu_custom_call.1} parent=1 // pred_check
      _
    $region3: #{tpu_custom_call.1} parent=1 // pred_check_branch
      %18 = sbr.rel (0) target = $region5
    $region4: #{tpu_custom_call.1} parent=1 // pred_region
      _
    $region5: #{tpu_custom_call.1} parent=1 // pred_fallthru
      _
    // Predicated region
    $region6: #{tpu_custom_call.1} parent=1 // pred_check
      _
    $region7: #{tpu_custom_call.1} parent=1 // pred_check_branch
      %20 = sbr.rel (0) target = $region9
    $region8: #{tpu_custom_call.1} parent=1 // pred_region
      _
    $region9: #{tpu_custom_call.1} parent=1 // pred_fallthru
      _
    // Predicated region
    $region10: #{tpu_custom_call.1} parent=1 // pred_check
      _
    $region11: #{tpu_custom_call.1} parent=1 // pred_check_branch
      %22 = sbr.rel (0) target = $region13
    $region12: #{tpu_custom_call.1} parent=1 // pred_region
      _
    $region13: #{tpu_custom_call.1} parent=1 // pred_fallthru
      _
    // Predicated region
    $region14: #{tpu_custom_call.1} parent=1 // pred_check
      _
    $region15: #{tpu_custom_call.1} parent=1 // pred_check_branch
      %24 = sbr.rel (0) target = $region17
    $region16: #{tpu_custom_call.1} parent=1 // pred_region
      _
    $region17: #{tpu_custom_call.1} parent=1 // pred_fallthru
      _
    // Predicated region
    $region18: #{tpu_custom_call.1} parent=1 // pred_check
      _
    $region19: #{tpu_custom_call.1} parent=1 // pred_check_branch
      %26 = sbr.rel (0) target = $region21
    $region20: #{tpu_custom_call.1} parent=1 // pred_region
      _
    $region21: #{tpu_custom_call.1} parent=1 // pred_fallthru
      _
    // Predicated region
    $region22: #{tpu_custom_call.1} parent=1 // pred_check
      _
    $region23: #{tpu_custom_call.1} parent=1 // pred_check_branch
      %28 = sbr.rel (0) target = $region25
    $region24: #{tpu_custom_call.1} parent=1 // pred_region
      %s30 = ssub.s32 256, 256
      %31 = vsyncadd [#allocation3], %s30
      %s32 = sshll.u32 [#allocation2], 4
      %s33 = int_to_ptr.vmem [resolvable:$true] %s32
      %38 = dma.hbm_to_vmem [thread:$0]  %s5, 256, %s33, [#allocation3], 64, 64, 4
    $region25: #{tpu_custom_call.1} parent=1 // pred_fallthru
      _
    // Predicated region
    $region26: #{tpu_custom_call.1} parent=1 // pred_check
      _
    $region27: #{tpu_custom_call.1} parent=1 // pred_check_branch
      %40 = sbr.rel (0) target = $region29
    $region28: #{tpu_custom_call.1} parent=1 // pred_region
      _
    $region29: #{tpu_custom_call.1} parent=1 // pred_fallthru
      _
    // Predicated region
    $region30: #{tpu_custom_call.1} parent=1 // pred_check
      _
    $region31: #{tpu_custom_call.1} parent=1 // pred_check_branch
      %42 = sbr.rel (0) target = $region33
    $region32: #{tpu_custom_call.1} parent=1 // pred_region
      %s44 = ssub.s32 256, 256
      %45 = vsyncadd [#allocation6], %s44
      %s46 = sshll.u32 [#allocation5], 4
      %s47 = int_to_ptr.vmem [resolvable:$true] %s46
      %52 = dma.hbm_to_vmem [thread:$0]  %s7, 256, %s47, [#allocation6], 64, 64, 4
    $region33: #{tpu_custom_call.1} parent=1 // pred_fallthru
      _
    // Predicated region
    $region34: #{tpu_custom_call.1} parent=1 // pred_check
      _
    $region35: #{tpu_custom_call.1} parent=1 // pred_check_branch
      %54 = sbr.rel (0) target = $region37
    $region36: #{tpu_custom_call.1} parent=1 // pred_region
      _
    $region37: #{tpu_custom_call.1} parent=1 // pred_fallthru
      _
    // Predicated region
    $region38: #{tpu_custom_call.1} parent=1 // pred_check
      _
    $region39: #{tpu_custom_call.1} parent=1 // pred_check_branch
      %56 = sbr.rel (0) target = $region41
    $region40: #{tpu_custom_call.1} parent=1 // pred_region
      %57 = dma.done [#allocation3], 256
    $region41: #{tpu_custom_call.1} parent=1 // pred_fallthru
      _
    // Predicated region
    $region42: #{tpu_custom_call.1} parent=1 // pred_check
      _
    $region43: #{tpu_custom_call.1} parent=1 // pred_check_branch
      %59 = sbr.rel (0) target = $region45
    $region44: #{tpu_custom_call.1} parent=1 // pred_region
      %60 = dma.done [#allocation6], 256
    $region45: #{tpu_custom_call.1} parent=1 // pred_fallthru
      _
    %v62 = vlaneseq
    %v63 = vand.u32 %v62, 127
    %vm64 = vcmp.ge.s32.totalorder %v63, 96
    %v65 = vld [vmem:[%s0] sm:$0xf]
    %v66 = vld [vmem:[%s0 + $0x4] sm:$0xf]
    %v67 = vld [vmem:[%s0 + $0x8] sm:$0xf]
    %v68 = vld [vmem:[%s0 + $0xc] sm:$0xf]
    %v69 = vld [vmem:[%s0 + $0x10] sm:$0xf]
    %v70 = vld [vmem:[%s0 + $0x14] sm:$0xf]
    %v71 = vld [vmem:[%s0 + $0x18] sm:$0xf]
    %v72 = vld [vmem:[%s0 + $0x1c] sm:$0xf]
    %v73 = vld [vmem:[%s1] sm:$0x3]
    %v74 = vld [vmem:[%s2] sm:$0xf]
    %v75 = vld [vmem:[%s2 + $0x4] sm:$0xf]
    %v76 = vld [vmem:[%s2 + $0x8] sm:$0xf]
    %v77 = vld [vmem:[%s2 + $0xc] sm:$0xf]
    %v78 = vld [vmem:[%s3] sm:$0x1]
    %v80 = vlaneseq
    %v81 = vshrl.u32 %v80, 7
    %v82 = vsub.s32 0, %v81
    %v83 = vrot.slane %v78, %v82
    %v93 = vunpack.c.l.b16 %v65
    %v94 = vunpack.c.l.b16 %v66
    %v95 = vunpack.c.l.b16 %v67
    %v96 = vunpack.c.l.b16 %v68
    %v97 = vunpack.c.l.b16 %v69
    %v98 = vunpack.c.l.b16 %v70
    %v99 = vunpack.c.l.b16 %v71
    %v100 = vunpack.c.l.b16 %v72
    %v101 = vpack.c.b16 %v94, %v93
    %v102 = vpack.c.b16 %v96, %v95
    %v103 = vpack.c.b16 %v98, %v97
    %v104 = vpack.c.b16 %v100, %v99
    %vm105 = vcmask 31744
    %v107 = vsel %vm105, %v101, 0
    %v110 = vsel %vm105, %v102, 0
    %v113 = vsel %vm105, %v103, 0
    %v116 = vsel %vm105, %v104, 0
    %vm118 = vcmask 1041408
    %v120 = vsel %vm118, %v73, 0
    %122 = vmatprep.subr.bf16.mxu0 0
    %123 = vmatpush1.bf16.msra.mxu0 0
    %124 = vmatprep.subr.bf16.mxu0 0
    %125 = vmatpush1.bf16.msra.mxu0 0
    %126 = vmatprep.subr.bf16.mxu0 0
    %127 = vmatpush1.bf16.msra.mxu0 0
    %128 = vmatprep.subr.bf16.mxu0 0
    %129 = vmatpush1.bf16.msra.mxu0 0
    %130 = vmatprep.subr.bf16.mxu0 0
    %131 = vmatpush1.bf16.msra.mxu0 0
    %132 = vmatprep.subr.bf16.mxu0 0
    %133 = vmatpush1.bf16.msra.mxu0 0
    %134 = vmatprep.subr.bf16.mxu0 0
    %135 = vmatpush1.bf16.msra.mxu0 0
    %136 = vmatprep.subr.bf16.mxu0 0
    %137 = vmatpush1.bf16.msra.mxu0 %v120
    %138 = vmatprep.subr.bf16.mxu0 0
    %139 = vmatpush2.bf16.msra.mxu0 0
    %140 = vmatprep.subr.bf16.mxu0 0
    %141 = vmatpush2.bf16.msra.mxu0 0
    %142 = vmatprep.subr.bf16.mxu0 0
    %143 = vmatpush2.bf16.msra.mxu0 0
    %144 = vmatprep.subr.bf16.mxu0 0
    %145 = vmatpush2.bf16.msra.mxu0 0
    %146 = vmatprep.subr.bf16.mxu0 0
    %147 = vmatpush2.bf16.msra.mxu0 0
    %148 = vmatprep.subr.bf16.mxu0 0
    %149 = vmatpush2.bf16.msra.mxu0 0
    %150 = vmatprep.subr.bf16.mxu0 0
    %151 = vmatpush2.bf16.msra.mxu0 0
    %152 = vmatprep.subr.bf16.mxu0 0
    %153 = vmatpush2.bf16.msra.mxu0 0
    %154 = vmatprep.mubr.bf16.mxu0 0
    %155 = vmatmul.mubr.bf16.gmra.mxu0 %v107
    %v156 = vpop.f32.mrf.mxu0
    %v157 = vadd.f32 %v83, %v156
    %v158 = vpop.f32.mrf.mxu0
    %v159 = vpop.f32.mrf.mxu0
    %v160 = vadd.f32 %v83, %v159
    %v161 = vpop.f32.mrf.mxu0
    %162 = vmatprep.mubr.bf16.mxu0 0
    %163 = vmatmul.mubr.bf16.gmra.mxu0 %v110
    %v164 = vpop.f32.mrf.mxu0
    %v165 = vadd.f32 %v83, %v164
    %v166 = vpop.f32.mrf.mxu0
    %v167 = vpop.f32.mrf.mxu0
    %v168 = vadd.f32 %v83, %v167
    %v169 = vpop.f32.mrf.mxu0
    %170 = vmatprep.mubr.bf16.mxu0 0
    %171 = vmatmul.mubr.bf16.gmra.mxu0 %v113
    %v172 = vpop.f32.mrf.mxu0
    %v173 = vadd.f32 %v83, %v172
    %v174 = vpop.f32.mrf.mxu0
    %v175 = vpop.f32.mrf.mxu0
    %v176 = vadd.f32 %v83, %v175
    %v177 = vpop.f32.mrf.mxu0
    %178 = vmatprep.mubr.bf16.mxu0 0
    %179 = vmatmul.mubr.bf16.gmra.mxu0 %v116
    %v180 = vpop.f32.mrf.mxu0
    %v181 = vadd.f32 %v83, %v180
    %v182 = vpop.f32.mrf.mxu0
    %v183 = vpop.f32.mrf.mxu0
    %v184 = vadd.f32 %v83, %v183
    %v185 = vpop.f32.mrf.mxu0
    %186 = vdwg.mxu0
    %v191 = vunpack.c.l.b16 %v74
    %v192 = vunpack.c.l.b16 %v75
    %v193 = vunpack.c.l.b16 %v76
    %v194 = vunpack.c.l.b16 %v77
    %v195 = vpack.c.b16 %v192, %v191
    %v196 = vpack.c.b16 %v194, %v193
    %vm199 = vcmask 261120
    %v201 = vsel %vm199, 0, 0
    %203 = vmatprep.subr.bf16.mxu0 0
    %204 = vmatpush1.bf16.msra.mxu0 0
    %205 = vmatprep.subr.bf16.mxu0 0
    %206 = vmatpush1.bf16.msra.mxu0 0
    %207 = vmatprep.subr.bf16.mxu0 0
    %208 = vmatpush1.bf16.msra.mxu0 0
    %209 = vmatprep.subr.bf16.mxu0 0
    %210 = vmatpush1.bf16.msra.mxu0 0
    %211 = vmatprep.subr.bf16.mxu0 0
    %212 = vmatpush1.bf16.msra.mxu0 0
    %213 = vmatprep.subr.bf16.mxu0 0
    %214 = vmatpush1.bf16.msra.mxu0 0
    %215 = vmatprep.subr.bf16.mxu0 0
    %216 = vmatpush1.bf16.msra.mxu0 %v196
    %217 = vmatprep.subr.bf16.mxu0 0
    %218 = vmatpush1.bf16.msra.mxu0 %v195
    %219 = vmatprep.subr.bf16.mxu0 0
    %220 = vmatpush2.bf16.msra.mxu0 0
    %221 = vmatprep.subr.bf16.mxu0 0
    %222 = vmatpush2.bf16.msra.mxu0 0
    %223 = vmatprep.subr.bf16.mxu0 0
    %224 = vmatpush2.bf16.msra.mxu0 0
    %225 = vmatprep.subr.bf16.mxu0 0
    %226 = vmatpush2.bf16.msra.mxu0 0
    %227 = vmatprep.subr.bf16.mxu0 0
    %228 = vmatpush2.bf16.msra.mxu0 0
    %229 = vmatprep.subr.bf16.mxu0 0
    %230 = vmatpush2.bf16.msra.mxu0 0
    %231 = vmatprep.subr.bf16.mxu0 0
    %232 = vmatpush2.bf16.msra.mxu0 0
    %233 = vmatprep.subr.bf16.mxu0 0
    %234 = vmatpush2.bf16.msra.mxu0 0
    %235 = vmatprep.mubr.bf16.mxu0 0
    %236 = vmatmul.mubr.bf16.gmra.mxu0 %v201
    %v237 = vpop.f32.mrf.mxu0
    %v238 = vadd.f32 0.0, %v237
    %v239 = vpop.f32.mrf.mxu0
    %v240 = vpop.f32.mrf.mxu0
    %v241 = vpop.f32.mrf.mxu0
    %242 = vdwg.mxu0
    %v243 = vadd.f32 %v157, %v238
    %v244 = vtanh.pop %v243
    %v245 = vxor.u32 %v243, 2147483648
    %v246 = vmul.f32 %v245, 1.442695
    %v247 = vpow.pop %v246
    %v248 = vadd.f32 %v247, 1.0
    %v249 = vrcp.pop %v248
    %v250 = vmul.f32 1.0, %v249
    %v251 = vsel %vm64, %v244, %v250
    %v252 = vmul.f32 %v251, 0.0
    %254 = vrot.lane.b32.xlu0 %v251, 32
    %v255 = vpop.permute.xlu0 %254
    %v257 = vmul.f32 %v251, %v255
    %259 = vrot.lane.b32.xlu0 %v257, 32
    %v260 = vpop.permute.xlu0 %259
    %v262 = vadd.f32 %v252, %v260
    %v263 = vtanh.pop %v262
    %265 = vrot.lane.b32.xlu0 %v263, 32
    %v266 = vpop.permute.xlu0 %265
    %v268 = vmul.f32 %v251, %v266
    %v269 = vpack.c.bf16 %v268, %v268
    %271 = vrot.lane.b32.xlu0 %v269, 64
    %v272 = vpop.permute.xlu0 %271
    %v274 = vsel %vm199, %v272, 0
    %276 = vmatprep.subr.bf16.mxu0 0
    %277 = vmatpush1.bf16.msra.mxu0 0
    %278 = vmatprep.subr.bf16.mxu0 0
    %279 = vmatpush1.bf16.msra.mxu0 0
    %280 = vmatprep.subr.bf16.mxu0 0
    %281 = vmatpush1.bf16.msra.mxu0 0
    %282 = vmatprep.subr.bf16.mxu0 0
    %283 = vmatpush1.bf16.msra.mxu0 0
    %284 = vmatprep.subr.bf16.mxu0 0
    %285 = vmatpush1.bf16.msra.mxu0 0
    %286 = vmatprep.subr.bf16.mxu0 0
    %287 = vmatpush1.bf16.msra.mxu0 0
    %288 = vmatprep.subr.bf16.mxu0 0
    %289 = vmatpush1.bf16.msra.mxu0 %v196
    %290 = vmatprep.subr.bf16.mxu0 0
    %291 = vmatpush1.bf16.msra.mxu0 %v195
    %292 = vmatprep.subr.bf16.mxu0 0
    %293 = vmatpush2.bf16.msra.mxu0 0
    %294 = vmatprep.subr.bf16.mxu0 0
    %295 = vmatpush2.bf16.msra.mxu0 0
    %296 = vmatprep.subr.bf16.mxu0 0
    %297 = vmatpush2.bf16.msra.mxu0 0
    %298 = vmatprep.subr.bf16.mxu0 0
    %299 = vmatpush2.bf16.msra.mxu0 0
    %300 = vmatprep.subr.bf16.mxu0 0
    %301 = vmatpush2.bf16.msra.mxu0 0
    %302 = vmatprep.subr.bf16.mxu0 0
    %303 = vmatpush2.bf16.msra.mxu0 0
    %304 = vmatprep.subr.bf16.mxu0 0
    %305 = vmatpush2.bf16.msra.mxu0 0
    %306 = vmatprep.subr.bf16.mxu0 0
    %307 = vmatpush2.bf16.msra.mxu0 0
    %308 = vmatprep.mubr.bf16.mxu0 0
    %309 = vmatmul.mubr.bf16.gmra.mxu0 %v274
    %v310 = vpop.f32.mrf.mxu0
    %v311 = vadd.f32 0.0, %v310
    %v312 = vpop.f32.mrf.mxu0
    %v313 = vpop.f32.mrf.mxu0
    %v314 = vpop.f32.mrf.mxu0
    %315 = vdwg.mxu0
    %v316 = vadd.f32 %v160, %v311
    %v317 = vtanh.pop %v316
    %v318 = vxor.u32 %v316, 2147483648
    %v319 = vmul.f32 %v318, 1.442695
    %v320 = vpow.pop %v319
    %v321 = vadd.f32 %v320, 1.0
    %v322 = vrcp.pop %v321
    %v323 = vmul.f32 1.0, %v322
    %v324 = vsel %vm64, %v317, %v323
    %v325 = vmul.f32 %v324, %v262
    %327 = vrot.lane.b32.xlu0 %v324, 32
    %v328 = vpop.permute.xlu0 %327
    %v330 = vmul.f32 %v324, %v328
    %332 = vrot.lane.b32.xlu0 %v330, 32
    %v333 = vpop.permute.xlu0 %332
    %v335 = vadd.f32 %v325, %v333
    %v336 = vtanh.pop %v335
    %338 = vrot.lane.b32.xlu0 %v336, 32
    %v339 = vpop.permute.xlu0 %338
    %v341 = vmul.f32 %v324, %v339
    %v342 = vpack.c.bf16 %v341, %v341
    %344 = vrot.lane.b32.xlu0 %v342, 64
    %v345 = vpop.permute.xlu0 %344
    %v347 = vsel %vm199, %v345, 0
    %349 = vmatprep.subr.bf16.mxu0 0
    %350 = vmatpush1.bf16.msra.mxu0 0
    %351 = vmatprep.subr.bf16.mxu0 0
    %352 = vmatpush1.bf16.msra.mxu0 0
    %353 = vmatprep.subr.bf16.mxu0 0
    %354 = vmatpush1.bf16.msra.mxu0 0
    %355 = vmatprep.subr.bf16.mxu0 0
    %356 = vmatpush1.bf16.msra.mxu0 0
    %357 = vmatprep.subr.bf16.mxu0 0
    %358 = vmatpush1.bf16.msra.mxu0 0
    %359 = vmatprep.subr.bf16.mxu0 0
    %360 = vmatpush1.bf16.msra.mxu0 0
    %361 = vmatprep.subr.bf16.mxu0 0
    %362 = vmatpush1.bf16.msra.mxu0 %v196
    %363 = vmatprep.subr.bf16.mxu0 0
    %364 = vmatpush1.bf16.msra.mxu0 %v195
    %365 = vmatprep.subr.bf16.mxu0 0
    %366 = vmatpush2.bf16.msra.mxu0 0
    %367 = vmatprep.subr.bf16.mxu0 0
    %368 = vmatpush2.bf16.msra.mxu0 0
    %369 = vmatprep.subr.bf16.mxu0 0
    %370 = vmatpush2.bf16.msra.mxu0 0
    %371 = vmatprep.subr.bf16.mxu0 0
    %372 = vmatpush2.bf16.msra.mxu0 0
    %373 = vmatprep.subr.bf16.mxu0 0
    %374 = vmatpush2.bf16.msra.mxu0 0
    %375 = vmatprep.subr.bf16.mxu0 0
    %376 = vmatpush2.bf16.msra.mxu0 0
    %377 = vmatprep.subr.bf16.mxu0 0
    %378 = vmatpush2.bf16.msra.mxu0 0
    %379 = vmatprep.subr.bf16.mxu0 0
    %380 = vmatpush2.bf16.msra.mxu0 0
    %381 = vmatprep.mubr.bf16.mxu0 0
    %382 = vmatmul.mubr.bf16.gmra.mxu0 %v347
    %v383 = vpop.f32.mrf.mxu0
    %v384 = vadd.f32 0.0, %v383
    %v385 = vpop.f32.mrf.mxu0
    %v386 = vpop.f32.mrf.mxu0
    %v387 = vpop.f32.mrf.mxu0
    %388 = vdwg.mxu0
    %v389 = vadd.f32 %v165, %v384
    %v390 = vtanh.pop %v389
    %v391 = vxor.u32 %v389, 2147483648
    %v392 = vmul.f32 %v391, 1.442695
    %v393 = vpow.pop %v392
    %v394 = vadd.f32 %v393, 1.0
    %v395 = vrcp.pop %v394
    %v396 = vmul.f32 1.0, %v395
    %v397 = vsel %vm64, %v390, %v396
    %v398 = vmul.f32 %v397, %v335
    %400 = vrot.lane.b32.xlu0 %v397, 32
    %v401 = vpop.permute.xlu0 %400
    %v403 = vmul.f32 %v397, %v401
    %405 = vrot.lane.b32.xlu0 %v403, 32
    %v406 = vpop.permute.xlu0 %405
    %v408 = vadd.f32 %v398, %v406
    %v409 = vtanh.pop %v408
    %411 = vrot.lane.b32.xlu0 %v409, 32
    %v412 = vpop.permute.xlu0 %411
    %v414 = vmul.f32 %v397, %v412
    %v415 = vpack.c.bf16 %v414, %v414
    %417 = vrot.lane.b32.xlu0 %v415, 64
    %v418 = vpop.permute.xlu0 %417
    %v420 = vsel %vm199, %v418, 0
    %422 = vmatprep.subr.bf16.mxu0 0
    %423 = vmatpush1.bf16.msra.mxu0 0
    %424 = vmatprep.subr.bf16.mxu0 0
    %425 = vmatpush1.bf16.msra.mxu0 0
    %426 = vmatprep.subr.bf16.mxu0 0
    %427 = vmatpush1.bf16.msra.mxu0 0
    %428 = vmatprep.subr.bf16.mxu0 0
    %429 = vmatpush1.bf16.msra.mxu0 0
    %430 = vmatprep.subr.bf16.mxu0 0
    %431 = vmatpush1.bf16.msra.mxu0 0
    %432 = vmatprep.subr.bf16.mxu0 0
    %433 = vmatpush1.bf16.msra.mxu0 0
    %434 = vmatprep.subr.bf16.mxu0 0
    %435 = vmatpush1.bf16.msra.mxu0 %v196
    %436 = vmatprep.subr.bf16.mxu0 0
    %437 = vmatpush1.bf16.msra.mxu0 %v195
    %438 = vmatprep.subr.bf16.mxu0 0
    %439 = vmatpush2.bf16.msra.mxu0 0
    %440 = vmatprep.subr.bf16.mxu0 0
    %441 = vmatpush2.bf16.msra.mxu0 0
    %442 = vmatprep.subr.bf16.mxu0 0
    %443 = vmatpush2.bf16.msra.mxu0 0
    %444 = vmatprep.subr.bf16.mxu0 0
    %445 = vmatpush2.bf16.msra.mxu0 0
    %446 = vmatprep.subr.bf16.mxu0 0
    %447 = vmatpush2.bf16.msra.mxu0 0
    %448 = vmatprep.subr.bf16.mxu0 0
    %449 = vmatpush2.bf16.msra.mxu0 0
    %450 = vmatprep.subr.bf16.mxu0 0
    %451 = vmatpush2.bf16.msra.mxu0 0
    %452 = vmatprep.subr.bf16.mxu0 0
    %453 = vmatpush2.bf16.msra.mxu0 0
    %454 = vmatprep.mubr.bf16.mxu0 0
    %455 = vmatmul.mubr.bf16.gmra.mxu0 %v420
    %v456 = vpop.f32.mrf.mxu0
    %v457 = vadd.f32 0.0, %v456
    %v458 = vpop.f32.mrf.mxu0
    %v459 = vpop.f32.mrf.mxu0
    %v460 = vpop.f32.mrf.mxu0
    %461 = vdwg.mxu0
    %v462 = vadd.f32 %v168, %v457
    %v463 = vtanh.pop %v462
    %v464 = vxor.u32 %v462, 2147483648
    %v465 = vmul.f32 %v464, 1.442695
    %v466 = vpow.pop %v465
    %v467 = vadd.f32 %v466, 1.0
    %v468 = vrcp.pop %v467
    %v469 = vmul.f32 1.0, %v468
    %v470 = vsel %vm64, %v463, %v469
    %v471 = vmul.f32 %v470, %v408
    %473 = vrot.lane.b32.xlu0 %v470, 32
    %v474 = vpop.permute.xlu0 %473
    %v476 = vmul.f32 %v470, %v474
    %478 = vrot.lane.b32.xlu0 %v476, 32
    %v479 = vpop.permute.xlu0 %478
    %v481 = vadd.f32 %v471, %v479
    %v482 = vtanh.pop %v481
    %484 = vrot.lane.b32.xlu0 %v482, 32
    %v485 = vpop.permute.xlu0 %484
    %v487 = vmul.f32 %v470, %v485
    %v488 = vpack.c.bf16 %v487, %v487
    %490 = vrot.lane.b32.xlu0 %v488, 64
    %v491 = vpop.permute.xlu0 %490
    %v493 = vsel %vm199, %v491, 0
    %495 = vmatprep.subr.bf16.mxu0 0
    %496 = vmatpush1.bf16.msra.mxu0 0
    %497 = vmatprep.subr.bf16.mxu0 0
    %498 = vmatpush1.bf16.msra.mxu0 0
    %499 = vmatprep.subr.bf16.mxu0 0
    %500 = vmatpush1.bf16.msra.mxu0 0
    %501 = vmatprep.subr.bf16.mxu0 0
    %502 = vmatpush1.bf16.msra.mxu0 0
    %503 = vmatprep.subr.bf16.mxu0 0
    %504 = vmatpush1.bf16.msra.mxu0 0
    %505 = vmatprep.subr.bf16.mxu0 0
    %506 = vmatpush1.bf16.msra.mxu0 0
    %507 = vmatprep.subr.bf16.mxu0 0
    %508 = vmatpush1.bf16.msra.mxu0 %v196
    %509 = vmatprep.subr.bf16.mxu0 0
    %510 = vmatpush1.bf16.msra.mxu0 %v195
    %511 = vmatprep.subr.bf16.mxu0 0
    %512 = vmatpush2.bf16.msra.mxu0 0
    %513 = vmatprep.subr.bf16.mxu0 0
    %514 = vmatpush2.bf16.msra.mxu0 0
    %515 = vmatprep.subr.bf16.mxu0 0
    %516 = vmatpush2.bf16.msra.mxu0 0
    %517 = vmatprep.subr.bf16.mxu0 0
    %518 = vmatpush2.bf16.msra.mxu0 0
    %519 = vmatprep.subr.bf16.mxu0 0
    %520 = vmatpush2.bf16.msra.mxu0 0
    %521 = vmatprep.subr.bf16.mxu0 0
    %522 = vmatpush2.bf16.msra.mxu0 0
    %523 = vmatprep.subr.bf16.mxu0 0
    %524 = vmatpush2.bf16.msra.mxu0 0
    %525 = vmatprep.subr.bf16.mxu0 0
    %526 = vmatpush2.bf16.msra.mxu0 0
    %527 = vmatprep.mubr.bf16.mxu0 0
    %528 = vmatmul.mubr.bf16.gmra.mxu0 %v493
    %v529 = vpop.f32.mrf.mxu0
    %v530 = vadd.f32 0.0, %v529
    %v531 = vpop.f32.mrf.mxu0
    %v532 = vpop.f32.mrf.mxu0
    %v533 = vpop.f32.mrf.mxu0
    %534 = vdwg.mxu0
    %v535 = vadd.f32 %v173, %v530
    %v536 = vtanh.pop %v535
    %v537 = vxor.u32 %v535, 2147483648
    %v538 = vmul.f32 %v537, 1.442695
    %v539 = vpow.pop %v538
    %v540 = vadd.f32 %v539, 1.0
    %v541 = vrcp.pop %v540
    %v542 = vmul.f32 1.0, %v541
    %v543 = vsel %vm64, %v536, %v542
    %v544 = vmul.f32 %v543, %v481
    %546 = vrot.lane.b32.xlu0 %v543, 32
    %v547 = vpop.permute.xlu0 %546
    %v549 = vmul.f32 %v543, %v547
    %551 = vrot.lane.b32.xlu0 %v549, 32
    %v552 = vpop.permute.xlu0 %551
    %v554 = vadd.f32 %v544, %v552
    %v555 = vtanh.pop %v554
    %557 = vrot.lane.b32.xlu0 %v555, 32
    %v558 = vpop.permute.xlu0 %557
    %v560 = vmul.f32 %v543, %v558
    %v561 = vpack.c.bf16 %v560, %v560
    %563 = vrot.lane.b32.xlu0 %v561, 64
    %v564 = vpop.permute.xlu0 %563
    %v566 = vsel %vm199, %v564, 0
    %568 = vmatprep.subr.bf16.mxu0 0
    %569 = vmatpush1.bf16.msra.mxu0 0
    %570 = vmatprep.subr.bf16.mxu0 0
    %571 = vmatpush1.bf16.msra.mxu0 0
    %572 = vmatprep.subr.bf16.mxu0 0
    %573 = vmatpush1.bf16.msra.mxu0 0
    %574 = vmatprep.subr.bf16.mxu0 0
    %575 = vmatpush1.bf16.msra.mxu0 0
    %576 = vmatprep.subr.bf16.mxu0 0
    %577 = vmatpush1.bf16.msra.mxu0 0
    %578 = vmatprep.subr.bf16.mxu0 0
    %579 = vmatpush1.bf16.msra.mxu0 0
    %580 = vmatprep.subr.bf16.mxu0 0
    %581 = vmatpush1.bf16.msra.mxu0 %v196
    %582 = vmatprep.subr.bf16.mxu0 0
    %583 = vmatpush1.bf16.msra.mxu0 %v195
    %584 = vmatprep.subr.bf16.mxu0 0
    %585 = vmatpush2.bf16.msra.mxu0 0
    %586 = vmatprep.subr.bf16.mxu0 0
    %587 = vmatpush2.bf16.msra.mxu0 0
    %588 = vmatprep.subr.bf16.mxu0 0
    %589 = vmatpush2.bf16.msra.mxu0 0
    %590 = vmatprep.subr.bf16.mxu0 0
    %591 = vmatpush2.bf16.msra.mxu0 0
    %592 = vmatprep.subr.bf16.mxu0 0
    %593 = vmatpush2.bf16.msra.mxu0 0
    %594 = vmatprep.subr.bf16.mxu0 0
    %595 = vmatpush2.bf16.msra.mxu0 0
    %596 = vmatprep.subr.bf16.mxu0 0
    %597 = vmatpush2.bf16.msra.mxu0 0
    %598 = vmatprep.subr.bf16.mxu0 0
    %599 = vmatpush2.bf16.msra.mxu0 0
    %600 = vmatprep.mubr.bf16.mxu0 0
    %601 = vmatmul.mubr.bf16.gmra.mxu0 %v566
    %v602 = vpop.f32.mrf.mxu0
    %v603 = vadd.f32 0.0, %v602
    %v604 = vpop.f32.mrf.mxu0
    %v605 = vpop.f32.mrf.mxu0
    %v606 = vpop.f32.mrf.mxu0
    %607 = vdwg.mxu0
    %v608 = vadd.f32 %v176, %v603
    %v609 = vtanh.pop %v608
    %v610 = vxor.u32 %v608, 2147483648
    %v611 = vmul.f32 %v610, 1.442695
    %v612 = vpow.pop %v611
    %v613 = vadd.f32 %v612, 1.0
    %v614 = vrcp.pop %v613
    %v615 = vmul.f32 1.0, %v614
    %v616 = vsel %vm64, %v609, %v615
    %v617 = vmul.f32 %v616, %v554
    %619 = vrot.lane.b32.xlu0 %v616, 32
    %v620 = vpop.permute.xlu0 %619
    %v622 = vmul.f32 %v616, %v620
    %624 = vrot.lane.b32.xlu0 %v622, 32
    %v625 = vpop.permute.xlu0 %624
    %v627 = vadd.f32 %v617, %v625
    %v628 = vtanh.pop %v627
    %630 = vrot.lane.b32.xlu0 %v628, 32
    %v631 = vpop.permute.xlu0 %630
    %v633 = vmul.f32 %v616, %v631
    %v634 = vpack.c.bf16 %v633, %v633
    %636 = vrot.lane.b32.xlu0 %v634, 64
    %v637 = vpop.permute.xlu0 %636
    %v639 = vsel %vm199, %v637, 0
    %641 = vmatprep.subr.bf16.mxu0 0
    %642 = vmatpush1.bf16.msra.mxu0 0
    %643 = vmatprep.subr.bf16.mxu0 0
    %644 = vmatpush1.bf16.msra.mxu0 0
    %645 = vmatprep.subr.bf16.mxu0 0
    %646 = vmatpush1.bf16.msra.mxu0 0
    %647 = vmatprep.subr.bf16.mxu0 0
    %648 = vmatpush1.bf16.msra.mxu0 0
    %649 = vmatprep.subr.bf16.mxu0 0
    %650 = vmatpush1.bf16.msra.mxu0 0
    %651 = vmatprep.subr.bf16.mxu0 0
    %652 = vmatpush1.bf16.msra.mxu0 0
    %653 = vmatprep.subr.bf16.mxu0 0
    %654 = vmatpush1.bf16.msra.mxu0 %v196
    %655 = vmatprep.subr.bf16.mxu0 0
    %656 = vmatpush1.bf16.msra.mxu0 %v195
    %657 = vmatprep.subr.bf16.mxu0 0
    %658 = vmatpush2.bf16.msra.mxu0 0
    %659 = vmatprep.subr.bf16.mxu0 0
    %660 = vmatpush2.bf16.msra.mxu0 0
    %661 = vmatprep.subr.bf16.mxu0 0
    %662 = vmatpush2.bf16.msra.mxu0 0
    %663 = vmatprep.subr.bf16.mxu0 0
    %664 = vmatpush2.bf16.msra.mxu0 0
    %665 = vmatprep.subr.bf16.mxu0 0
    %666 = vmatpush2.bf16.msra.mxu0 0
    %667 = vmatprep.subr.bf16.mxu0 0
    %668 = vmatpush2.bf16.msra.mxu0 0
    %669 = vmatprep.subr.bf16.mxu0 0
    %670 = vmatpush2.bf16.msra.mxu0 0
    %671 = vmatprep.subr.bf16.mxu0 0
    %672 = vmatpush2.bf16.msra.mxu0 0
    %673 = vmatprep.mubr.bf16.mxu0 0
    %674 = vmatmul.mubr.bf16.gmra.mxu0 %v639
    %v675 = vpop.f32.mrf.mxu0
    %v676 = vadd.f32 0.0, %v675
    %v677 = vpop.f32.mrf.mxu0
    %v678 = vpop.f32.mrf.mxu0
    %v679 = vpop.f32.mrf.mxu0
    %680 = vdwg.mxu0
    %v681 = vadd.f32 %v181, %v676
    %v682 = vtanh.pop %v681
    %v683 = vxor.u32 %v681, 2147483648
    %v684 = vmul.f32 %v683, 1.442695
    %v685 = vpow.pop %v684
    %v686 = vadd.f32 %v685, 1.0
    %v687 = vrcp.pop %v686
    %v688 = vmul.f32 1.0, %v687
    %v689 = vsel %vm64, %v682, %v688
    %v690 = vmul.f32 %v689, %v627
    %692 = vrot.lane.b32.xlu0 %v689, 32
    %v693 = vpop.permute.xlu0 %692
    %v695 = vmul.f32 %v689, %v693
    %697 = vrot.lane.b32.xlu0 %v695, 32
    %v698 = vpop.permute.xlu0 %697
    %v700 = vadd.f32 %v690, %v698
    %v701 = vtanh.pop %v700
    %703 = vrot.lane.b32.xlu0 %v701, 32
    %v704 = vpop.permute.xlu0 %703
    %v706 = vmul.f32 %v689, %v704
    %v707 = vpack.c.bf16 %v706, %v706
    %709 = vrot.lane.b32.xlu0 %v707, 64
    %v710 = vpop.permute.xlu0 %709
    %v712 = vsel %vm199, %v710, 0
    %714 = vmatprep.subr.bf16.mxu0 0
    %715 = vmatpush1.bf16.msra.mxu0 0
    %716 = vmatprep.subr.bf16.mxu0 0
    %717 = vmatpush1.bf16.msra.mxu0 0
    %718 = vmatprep.subr.bf16.mxu0 0
    %719 = vmatpush1.bf16.msra.mxu0 0
    %720 = vmatprep.subr.bf16.mxu0 0
    %721 = vmatpush1.bf16.msra.mxu0 0
    %722 = vmatprep.subr.bf16.mxu0 0
    %723 = vmatpush1.bf16.msra.mxu0 0
    %724 = vmatprep.subr.bf16.mxu0 0
    %725 = vmatpush1.bf16.msra.mxu0 0
    %726 = vmatprep.subr.bf16.mxu0 0
    %727 = vmatpush1.bf16.msra.mxu0 %v196
    %728 = vmatprep.subr.bf16.mxu0 0
    %729 = vmatpush1.bf16.msra.mxu0 %v195
    %730 = vmatprep.subr.bf16.mxu0 0
    %731 = vmatpush2.bf16.msra.mxu0 0
    %732 = vmatprep.subr.bf16.mxu0 0
    %733 = vmatpush2.bf16.msra.mxu0 0
    %734 = vmatprep.subr.bf16.mxu0 0
    %735 = vmatpush2.bf16.msra.mxu0 0
    %736 = vmatprep.subr.bf16.mxu0 0
    %737 = vmatpush2.bf16.msra.mxu0 0
    %738 = vmatprep.subr.bf16.mxu0 0
    %739 = vmatpush2.bf16.msra.mxu0 0
    %740 = vmatprep.subr.bf16.mxu0 0
    %741 = vmatpush2.bf16.msra.mxu0 0
    %742 = vmatprep.subr.bf16.mxu0 0
    %743 = vmatpush2.bf16.msra.mxu0 0
    %744 = vmatprep.subr.bf16.mxu0 0
    %745 = vmatpush2.bf16.msra.mxu0 0
    %746 = vmatprep.mubr.bf16.mxu0 0
    %747 = vmatmul.mubr.bf16.gmra.mxu0 %v712
    %v748 = vpop.f32.mrf.mxu0
    %v749 = vadd.f32 0.0, %v748
    %v750 = vpop.f32.mrf.mxu0
    %v751 = vpop.f32.mrf.mxu0
    %v752 = vpop.f32.mrf.mxu0
    %753 = vdwg.mxu0
    %v754 = vadd.f32 %v184, %v749
    %v755 = vtanh.pop %v754
    %v756 = vxor.u32 %v754, 2147483648
    %v757 = vmul.f32 %v756, 1.442695
    %v758 = vpow.pop %v757
    %v759 = vadd.f32 %v758, 1.0
    %v760 = vrcp.pop %v759
    %v761 = vmul.f32 1.0, %v760
    %v762 = vsel %vm64, %v755, %v761
    %v763 = vmul.f32 %v762, %v700
    %765 = vrot.lane.b32.xlu0 %v762, 32
    %v766 = vpop.permute.xlu0 %765
    %v768 = vmul.f32 %v762, %v766
    %770 = vrot.lane.b32.xlu0 %v768, 32
    %v771 = vpop.permute.xlu0 %770
    %v773 = vadd.f32 %v763, %v771
    %v774 = vtanh.pop %v773
    %776 = vrot.lane.b32.xlu0 %v774, 32
    %v777 = vpop.permute.xlu0 %776
    %v779 = vmul.f32 %v762, %v777
    %v780 = vpack.c.bf16 %v341, %v268
    %v781 = vpack.c.bf16 %v487, %v414
    %v782 = vpack.c.bf16 %v633, %v560
    %v783 = vpack.c.bf16 %v779, %v706
    %v784 = vld [vmem:[%s4] sm:$0xf]
    %v785 = vld [vmem:[%s4 + $0x4] sm:$0xf]
    %v786 = vld [vmem:[%s4 + $0x8] sm:$0xf]
    %v787 = vld [vmem:[%s4 + $0xc] sm:$0xf]
    %v788 = vld [vmem:[#allocation2] sm:$0xf]
    %v789 = vld [vmem:[#allocation2 + $0x4] sm:$0xf]
    %v790 = vld [vmem:[#allocation2 + $0x8] sm:$0xf]
    %v791 = vld [vmem:[#allocation2 + $0xc] sm:$0xf]
    %v792 = vld [vmem:[%s6] sm:$0x1]
    %v794 = vlaneseq
    %v795 = vshrl.u32 %v794, 7
    %v796 = vsub.s32 0, %v795
    %v797 = vrot.slane %v792, %v796
    %803 = vrot.lane.b32.xlu0 %v780, 64
    %v804 = vpop.permute.xlu0 %803
    %805 = vrot.lane.b32.xlu0 %v781, 64
    %v806 = vpop.permute.xlu0 %805
    %807 = vrot.lane.b32.xlu0 %v782, 64
    %v808 = vpop.permute.xlu0 %807
    %809 = vrot.lane.b32.xlu0 %v783, 64
    %v810 = vpop.permute.xlu0 %809
    %v815 = vunpack.c.l.b16 %v784
    %v816 = vunpack.c.l.b16 %v785
    %v817 = vunpack.c.l.b16 %v786
    %v818 = vunpack.c.l.b16 %v787
    %v819 = vpack.c.b16 %v816, %v815
    %v820 = vpack.c.b16 %v818, %v817
    %v824 = vsel %vm199, %v804, 0
    %v827 = vsel %vm199, %v806, 0
    %v830 = vsel %vm199, %v808, 0
    %v833 = vsel %vm199, %v810, 0
    %835 = vmatprep.subr.bf16.mxu0 0
    %836 = vmatpush1.bf16.msra.mxu0 0
    %837 = vmatprep.subr.bf16.mxu0 0
    %838 = vmatpush1.bf16.msra.mxu0 0
    %839 = vmatprep.subr.bf16.mxu0 0
    %840 = vmatpush1.bf16.msra.mxu0 0
    %841 = vmatprep.subr.bf16.mxu0 0
    %842 = vmatpush1.bf16.msra.mxu0 0
    %843 = vmatprep.subr.bf16.mxu0 0
    %844 = vmatpush1.bf16.msra.mxu0 0
    %845 = vmatprep.subr.bf16.mxu0 0
    %846 = vmatpush1.bf16.msra.mxu0 0
    %847 = vmatprep.subr.bf16.mxu0 0
    %848 = vmatpush1.bf16.msra.mxu0 %v820
    %849 = vmatprep.subr.bf16.mxu0 0
    %850 = vmatpush1.bf16.msra.mxu0 %v819
    %851 = vmatprep.subr.bf16.mxu0 0
    %852 = vmatpush2.bf16.msra.mxu0 0
    %853 = vmatprep.subr.bf16.mxu0 0
    %854 = vmatpush2.bf16.msra.mxu0 0
    %855 = vmatprep.subr.bf16.mxu0 0
    %856 = vmatpush2.bf16.msra.mxu0 0
    %857 = vmatprep.subr.bf16.mxu0 0
    %858 = vmatpush2.bf16.msra.mxu0 0
    %859 = vmatprep.subr.bf16.mxu0 0
    %860 = vmatpush2.bf16.msra.mxu0 0
    %861 = vmatprep.subr.bf16.mxu0 0
    %862 = vmatpush2.bf16.msra.mxu0 0
    %863 = vmatprep.subr.bf16.mxu0 0
    %864 = vmatpush2.bf16.msra.mxu0 0
    %865 = vmatprep.subr.bf16.mxu0 0
    %866 = vmatpush2.bf16.msra.mxu0 0
    %867 = vmatprep.mubr.bf16.mxu0 0
    %868 = vmatmul.mubr.bf16.gmra.mxu0 %v824
    %v869 = vpop.f32.mrf.mxu0
    %v870 = vadd.f32 %v797, %v869
    %v871 = vpop.f32.mrf.mxu0
    %v872 = vpop.f32.mrf.mxu0
    %v873 = vadd.f32 %v797, %v872
    %v874 = vpop.f32.mrf.mxu0
    %875 = vmatprep.mubr.bf16.mxu0 0
    %876 = vmatmul.mubr.bf16.gmra.mxu0 %v827
    %v877 = vpop.f32.mrf.mxu0
    %v878 = vadd.f32 %v797, %v877
    %v879 = vpop.f32.mrf.mxu0
    %v880 = vpop.f32.mrf.mxu0
    %v881 = vadd.f32 %v797, %v880
    %v882 = vpop.f32.mrf.mxu0
    %883 = vmatprep.mubr.bf16.mxu0 0
    %884 = vmatmul.mubr.bf16.gmra.mxu0 %v830
    %v885 = vpop.f32.mrf.mxu0
    %v886 = vadd.f32 %v797, %v885
    %v887 = vpop.f32.mrf.mxu0
    %v888 = vpop.f32.mrf.mxu0
    %v889 = vadd.f32 %v797, %v888
    %v890 = vpop.f32.mrf.mxu0
    %891 = vmatprep.mubr.bf16.mxu0 0
    %892 = vmatmul.mubr.bf16.gmra.mxu0 %v833
    %v893 = vpop.f32.mrf.mxu0
    %v894 = vadd.f32 %v797, %v893
    %v895 = vpop.f32.mrf.mxu0
    %v896 = vpop.f32.mrf.mxu0
    %v897 = vadd.f32 %v797, %v896
    %v898 = vpop.f32.mrf.mxu0
    %899 = vdwg.mxu0
    %v904 = vunpack.c.l.b16 %v788
    %v905 = vunpack.c.l.b16 %v789
    %v906 = vunpack.c.l.b16 %v790
    %v907 = vunpack.c.l.b16 %v791
    %v908 = vpack.c.b16 %v905, %v904
    %v909 = vpack.c.b16 %v907, %v906
    %912 = vmatprep.subr.bf16.mxu0 0
    %913 = vmatpush1.bf16.msra.mxu0 0
    %914 = vmatprep.subr.bf16.mxu0 0
    %915 = vmatpush1.bf16.msra.mxu0 0
    %916 = vmatprep.subr.bf16.mxu0 0
    %917 = vmatpush1.bf16.msra.mxu0 0
    %918 = vmatprep.subr.bf16.mxu0 0
    %919 = vmatpush1.bf16.msra.mxu0 0
    %920 = vmatprep.subr.bf16.mxu0 0
    %921 = vmatpush1.bf16.msra.mxu0 0
    %922 = vmatprep.subr.bf16.mxu0 0
    %923 = vmatpush1.bf16.msra.mxu0 0
    %924 = vmatprep.subr.bf16.mxu0 0
    %925 = vmatpush1.bf16.msra.mxu0 %v909
    %926 = vmatprep.subr.bf16.mxu0 0
    %927 = vmatpush1.bf16.msra.mxu0 %v908
    %928 = vmatprep.subr.bf16.mxu0 0
    %929 = vmatpush2.bf16.msra.mxu0 0
    %930 = vmatprep.subr.bf16.mxu0 0
    %931 = vmatpush2.bf16.msra.mxu0 0
    %932 = vmatprep.subr.bf16.mxu0 0
    %933 = vmatpush2.bf16.msra.mxu0 0
    %934 = vmatprep.subr.bf16.mxu0 0
    %935 = vmatpush2.bf16.msra.mxu0 0
    %936 = vmatprep.subr.bf16.mxu0 0
    %937 = vmatpush2.bf16.msra.mxu0 0
    %938 = vmatprep.subr.bf16.mxu0 0
    %939 = vmatpush2.bf16.msra.mxu0 0
    %940 = vmatprep.subr.bf16.mxu0 0
    %941 = vmatpush2.bf16.msra.mxu0 0
    %942 = vmatprep.subr.bf16.mxu0 0
    %943 = vmatpush2.bf16.msra.mxu0 0
    %944 = vmatprep.mubr.bf16.mxu0 0
    %945 = vmatmul.mubr.bf16.gmra.mxu0 %v201
    %v946 = vpop.f32.mrf.mxu0
    %v947 = vadd.f32 0.0, %v946
    %v948 = vpop.f32.mrf.mxu0
    %v949 = vpop.f32.mrf.mxu0
    %v950 = vpop.f32.mrf.mxu0
    %951 = vdwg.mxu0
    %v952 = vadd.f32 %v870, %v947
    %v953 = vtanh.pop %v952
    %v954 = vxor.u32 %v952, 2147483648
    %v955 = vmul.f32 %v954, 1.442695
    %v956 = vpow.pop %v955
    %v957 = vadd.f32 %v956, 1.0
    %v958 = vrcp.pop %v957
    %v959 = vmul.f32 1.0, %v958
    %v960 = vsel %vm64, %v953, %v959
    %v961 = vmul.f32 %v960, 0.0
    %963 = vrot.lane.b32.xlu0 %v960, 32
    %v964 = vpop.permute.xlu0 %963
    %v966 = vmul.f32 %v960, %v964
    %968 = vrot.lane.b32.xlu0 %v966, 32
    %v969 = vpop.permute.xlu0 %968
    %v971 = vadd.f32 %v961, %v969
    %v972 = vtanh.pop %v971
    %974 = vrot.lane.b32.xlu0 %v972, 32
    %v975 = vpop.permute.xlu0 %974
    %v977 = vmul.f32 %v960, %v975
    %v978 = vpack.c.bf16 %v977, %v977
    %980 = vrot.lane.b32.xlu0 %v978, 64
    %v981 = vpop.permute.xlu0 %980
    %v983 = vsel %vm199, %v981, 0
    %985 = vmatprep.subr.bf16.mxu0 0
    %986 = vmatpush1.bf16.msra.mxu0 0
    %987 = vmatprep.subr.bf16.mxu0 0
    %988 = vmatpush1.bf16.msra.mxu0 0
    %989 = vmatprep.subr.bf16.mxu0 0
    %990 = vmatpush1.bf16.msra.mxu0 0
    %991 = vmatprep.subr.bf16.mxu0 0
    %992 = vmatpush1.bf16.msra.mxu0 0
    %993 = vmatprep.subr.bf16.mxu0 0
    %994 = vmatpush1.bf16.msra.mxu0 0
    %995 = vmatprep.subr.bf16.mxu0 0
    %996 = vmatpush1.bf16.msra.mxu0 0
    %997 = vmatprep.subr.bf16.mxu0 0
    %998 = vmatpush1.bf16.msra.mxu0 %v909
    %999 = vmatprep.subr.bf16.mxu0 0
    %1000 = vmatpush1.bf16.msra.mxu0 %v908
    %1001 = vmatprep.subr.bf16.mxu0 0
    %1002 = vmatpush2.bf16.msra.mxu0 0
    %1003 = vmatprep.subr.bf16.mxu0 0
    %1004 = vmatpush2.bf16.msra.mxu0 0
    %1005 = vmatprep.subr.bf16.mxu0 0
    %1006 = vmatpush2.bf16.msra.mxu0 0
    %1007 = vmatprep.subr.bf16.mxu0 0
    %1008 = vmatpush2.bf16.msra.mxu0 0
    %1009 = vmatprep.subr.bf16.mxu0 0
    %1010 = vmatpush2.bf16.msra.mxu0 0
    %1011 = vmatprep.subr.bf16.mxu0 0
    %1012 = vmatpush2.bf16.msra.mxu0 0
    %1013 = vmatprep.subr.bf16.mxu0 0
    %1014 = vmatpush2.bf16.msra.mxu0 0
    %1015 = vmatprep.subr.bf16.mxu0 0
    %1016 = vmatpush2.bf16.msra.mxu0 0
    %1017 = vmatprep.mubr.bf16.mxu0 0
    %1018 = vmatmul.mubr.bf16.gmra.mxu0 %v983
    %v1019 = vpop.f32.mrf.mxu0
    %v1020 = vadd.f32 0.0, %v1019
    %v1021 = vpop.f32.mrf.mxu0
    %v1022 = vpop.f32.mrf.mxu0
    %v1023 = vpop.f32.mrf.mxu0
    %1024 = vdwg.mxu0
    %v1025 = vadd.f32 %v873, %v1020
    %v1026 = vtanh.pop %v1025
    %v1027 = vxor.u32 %v1025, 2147483648
    %v1028 = vmul.f32 %v1027, 1.442695
    %v1029 = vpow.pop %v1028
    %v1030 = vadd.f32 %v1029, 1.0
    %v1031 = vrcp.pop %v1030
    %v1032 = vmul.f32 1.0, %v1031
    %v1033 = vsel %vm64, %v1026, %v1032
    %v1034 = vmul.f32 %v1033, %v971
    %1036 = vrot.lane.b32.xlu0 %v1033, 32
    %v1037 = vpop.permute.xlu0 %1036
    %v1039 = vmul.f32 %v1033, %v1037
    %1041 = vrot.lane.b32.xlu0 %v1039, 32
    %v1042 = vpop.permute.xlu0 %1041
    %v1044 = vadd.f32 %v1034, %v1042
    %v1045 = vtanh.pop %v1044
    %1047 = vrot.lane.b32.xlu0 %v1045, 32
    %v1048 = vpop.permute.xlu0 %1047
    %v1050 = vmul.f32 %v1033, %v1048
    %v1051 = vpack.c.bf16 %v1050, %v1050
    %1053 = vrot.lane.b32.xlu0 %v1051, 64
    %v1054 = vpop.permute.xlu0 %1053
    %v1056 = vsel %vm199, %v1054, 0
    %1058 = vmatprep.subr.bf16.mxu0 0
    %1059 = vmatpush1.bf16.msra.mxu0 0
    %1060 = vmatprep.subr.bf16.mxu0 0
    %1061 = vmatpush1.bf16.msra.mxu0 0
    %1062 = vmatprep.subr.bf16.mxu0 0
    %1063 = vmatpush1.bf16.msra.mxu0 0
    %1064 = vmatprep.subr.bf16.mxu0 0
    %1065 = vmatpush1.bf16.msra.mxu0 0
    %1066 = vmatprep.subr.bf16.mxu0 0
    %1067 = vmatpush1.bf16.msra.mxu0 0
    %1068 = vmatprep.subr.bf16.mxu0 0
    %1069 = vmatpush1.bf16.msra.mxu0 0
    %1070 = vmatprep.subr.bf16.mxu0 0
    %1071 = vmatpush1.bf16.msra.mxu0 %v909
    %1072 = vmatprep.subr.bf16.mxu0 0
    %1073 = vmatpush1.bf16.msra.mxu0 %v908
    %1074 = vmatprep.subr.bf16.mxu0 0
    %1075 = vmatpush2.bf16.msra.mxu0 0
    %1076 = vmatprep.subr.bf16.mxu0 0
    %1077 = vmatpush2.bf16.msra.mxu0 0
    %1078 = vmatprep.subr.bf16.mxu0 0
    %1079 = vmatpush2.bf16.msra.mxu0 0
    %1080 = vmatprep.subr.bf16.mxu0 0
    %1081 = vmatpush2.bf16.msra.mxu0 0
    %1082 = vmatprep.subr.bf16.mxu0 0
    %1083 = vmatpush2.bf16.msra.mxu0 0
    %1084 = vmatprep.subr.bf16.mxu0 0
    %1085 = vmatpush2.bf16.msra.mxu0 0
    %1086 = vmatprep.subr.bf16.mxu0 0
    %1087 = vmatpush2.bf16.msra.mxu0 0
    %1088 = vmatprep.subr.bf16.mxu0 0
    %1089 = vmatpush2.bf16.msra.mxu0 0
    %1090 = vmatprep.mubr.bf16.mxu0 0
    %1091 = vmatmul.mubr.bf16.gmra.mxu0 %v1056
    %v1092 = vpop.f32.mrf.mxu0
    %v1093 = vadd.f32 0.0, %v1092
    %v1094 = vpop.f32.mrf.mxu0
    %v1095 = vpop.f32.mrf.mxu0
    %v1096 = vpop.f32.mrf.mxu0
    %1097 = vdwg.mxu0
    %v1098 = vadd.f32 %v878, %v1093
    %v1099 = vtanh.pop %v1098
    %v1100 = vxor.u32 %v1098, 2147483648
    %v1101 = vmul.f32 %v1100, 1.442695
    %v1102 = vpow.pop %v1101
    %v1103 = vadd.f32 %v1102, 1.0
    %v1104 = vrcp.pop %v1103
    %v1105 = vmul.f32 1.0, %v1104
    %v1106 = vsel %vm64, %v1099, %v1105
    %v1107 = vmul.f32 %v1106, %v1044
    %1109 = vrot.lane.b32.xlu0 %v1106, 32
    %v1110 = vpop.permute.xlu0 %1109
    %v1112 = vmul.f32 %v1106, %v1110
    %1114 = vrot.lane.b32.xlu0 %v1112, 32
    %v1115 = vpop.permute.xlu0 %1114
    %v1117 = vadd.f32 %v1107, %v1115
    %v1118 = vtanh.pop %v1117
    %1120 = vrot.lane.b32.xlu0 %v1118, 32
    %v1121 = vpop.permute.xlu0 %1120
    %v1123 = vmul.f32 %v1106, %v1121
    %v1124 = vpack.c.bf16 %v1123, %v1123
    %1126 = vrot.lane.b32.xlu0 %v1124, 64
    %v1127 = vpop.permute.xlu0 %1126
    %v1129 = vsel %vm199, %v1127, 0
    %1131 = vmatprep.subr.bf16.mxu0 0
    %1132 = vmatpush1.bf16.msra.mxu0 0
    %1133 = vmatprep.subr.bf16.mxu0 0
    %1134 = vmatpush1.bf16.msra.mxu0 0
    %1135 = vmatprep.subr.bf16.mxu0 0
    %1136 = vmatpush1.bf16.msra.mxu0 0
    %1137 = vmatprep.subr.bf16.mxu0 0
    %1138 = vmatpush1.bf16.msra.mxu0 0
    %1139 = vmatprep.subr.bf16.mxu0 0
    %1140 = vmatpush1.bf16.msra.mxu0 0
    %1141 = vmatprep.subr.bf16.mxu0 0
    %1142 = vmatpush1.bf16.msra.mxu0 0
    %1143 = vmatprep.subr.bf16.mxu0 0
    %1144 = vmatpush1.bf16.msra.mxu0 %v909
    %1145 = vmatprep.subr.bf16.mxu0 0
    %1146 = vmatpush1.bf16.msra.mxu0 %v908
    %1147 = vmatprep.subr.bf16.mxu0 0
    %1148 = vmatpush2.bf16.msra.mxu0 0
    %1149 = vmatprep.subr.bf16.mxu0 0
    %1150 = vmatpush2.bf16.msra.mxu0 0
    %1151 = vmatprep.subr.bf16.mxu0 0
    %1152 = vmatpush2.bf16.msra.mxu0 0
    %1153 = vmatprep.subr.bf16.mxu0 0
    %1154 = vmatpush2.bf16.msra.mxu0 0
    %1155 = vmatprep.subr.bf16.mxu0 0
    %1156 = vmatpush2.bf16.msra.mxu0 0
    %1157 = vmatprep.subr.bf16.mxu0 0
    %1158 = vmatpush2.bf16.msra.mxu0 0
    %1159 = vmatprep.subr.bf16.mxu0 0
    %1160 = vmatpush2.bf16.msra.mxu0 0
    %1161 = vmatprep.subr.bf16.mxu0 0
    %1162 = vmatpush2.bf16.msra.mxu0 0
    %1163 = vmatprep.mubr.bf16.mxu0 0
    %1164 = vmatmul.mubr.bf16.gmra.mxu0 %v1129
    %v1165 = vpop.f32.mrf.mxu0
    %v1166 = vadd.f32 0.0, %v1165
    %v1167 = vpop.f32.mrf.mxu0
    %v1168 = vpop.f32.mrf.mxu0
    %v1169 = vpop.f32.mrf.mxu0
    %1170 = vdwg.mxu0
    %v1171 = vadd.f32 %v881, %v1166
    %v1172 = vtanh.pop %v1171
    %v1173 = vxor.u32 %v1171, 2147483648
    %v1174 = vmul.f32 %v1173, 1.442695
    %v1175 = vpow.pop %v1174
    %v1176 = vadd.f32 %v1175, 1.0
    %v1177 = vrcp.pop %v1176
    %v1178 = vmul.f32 1.0, %v1177
    %v1179 = vsel %vm64, %v1172, %v1178
    %v1180 = vmul.f32 %v1179, %v1117
    %1182 = vrot.lane.b32.xlu0 %v1179, 32
    %v1183 = vpop.permute.xlu0 %1182
    %v1185 = vmul.f32 %v1179, %v1183
    %1187 = vrot.lane.b32.xlu0 %v1185, 32
    %v1188 = vpop.permute.xlu0 %1187
    %v1190 = vadd.f32 %v1180, %v1188
    %v1191 = vtanh.pop %v1190
    %1193 = vrot.lane.b32.xlu0 %v1191, 32
    %v1194 = vpop.permute.xlu0 %1193
    %v1196 = vmul.f32 %v1179, %v1194
    %v1197 = vpack.c.bf16 %v1196, %v1196
    %1199 = vrot.lane.b32.xlu0 %v1197, 64
    %v1200 = vpop.permute.xlu0 %1199
    %v1202 = vsel %vm199, %v1200, 0
    %1204 = vmatprep.subr.bf16.mxu0 0
    %1205 = vmatpush1.bf16.msra.mxu0 0
    %1206 = vmatprep.subr.bf16.mxu0 0
    %1207 = vmatpush1.bf16.msra.mxu0 0
    %1208 = vmatprep.subr.bf16.mxu0 0
    %1209 = vmatpush1.bf16.msra.mxu0 0
    %1210 = vmatprep.subr.bf16.mxu0 0
    %1211 = vmatpush1.bf16.msra.mxu0 0
    %1212 = vmatprep.subr.bf16.mxu0 0
    %1213 = vmatpush1.bf16.msra.mxu0 0
    %1214 = vmatprep.subr.bf16.mxu0 0
    %1215 = vmatpush1.bf16.msra.mxu0 0
    %1216 = vmatprep.subr.bf16.mxu0 0
    %1217 = vmatpush1.bf16.msra.mxu0 %v909
    %1218 = vmatprep.subr.bf16.mxu0 0
    %1219 = vmatpush1.bf16.msra.mxu0 %v908
    %1220 = vmatprep.subr.bf16.mxu0 0
    %1221 = vmatpush2.bf16.msra.mxu0 0
    %1222 = vmatprep.subr.bf16.mxu0 0
    %1223 = vmatpush2.bf16.msra.mxu0 0
    %1224 = vmatprep.subr.bf16.mxu0 0
    %1225 = vmatpush2.bf16.msra.mxu0 0
    %1226 = vmatprep.subr.bf16.mxu0 0
    %1227 = vmatpush2.bf16.msra.mxu0 0
    %1228 = vmatprep.subr.bf16.mxu0 0
    %1229 = vmatpush2.bf16.msra.mxu0 0
    %1230 = vmatprep.subr.bf16.mxu0 0
    %1231 = vmatpush2.bf16.msra.mxu0 0
    %1232 = vmatprep.subr.bf16.mxu0 0
    %1233 = vmatpush2.bf16.msra.mxu0 0
    %1234 = vmatprep.subr.bf16.mxu0 0
    %1235 = vmatpush2.bf16.msra.mxu0 0
    %1236 = vmatprep.mubr.bf16.mxu0 0
    %1237 = vmatmul.mubr.bf16.gmra.mxu0 %v1202
    %v1238 = vpop.f32.mrf.mxu0
    %v1239 = vadd.f32 0.0, %v1238
    %v1240 = vpop.f32.mrf.mxu0
    %v1241 = vpop.f32.mrf.mxu0
    %v1242 = vpop.f32.mrf.mxu0
    %1243 = vdwg.mxu0
    %v1244 = vadd.f32 %v886, %v1239
    %v1245 = vtanh.pop %v1244
    %v1246 = vxor.u32 %v1244, 2147483648
    %v1247 = vmul.f32 %v1246, 1.442695
    %v1248 = vpow.pop %v1247
    %v1249 = vadd.f32 %v1248, 1.0
    %v1250 = vrcp.pop %v1249
    %v1251 = vmul.f32 1.0, %v1250
    %v1252 = vsel %vm64, %v1245, %v1251
    %v1253 = vmul.f32 %v1252, %v1190
    %1255 = vrot.lane.b32.xlu0 %v1252, 32
    %v1256 = vpop.permute.xlu0 %1255
    %v1258 = vmul.f32 %v1252, %v1256
    %1260 = vrot.lane.b32.xlu0 %v1258, 32
    %v1261 = vpop.permute.xlu0 %1260
    %v1263 = vadd.f32 %v1253, %v1261
    %v1264 = vtanh.pop %v1263
    %1266 = vrot.lane.b32.xlu0 %v1264, 32
    %v1267 = vpop.permute.xlu0 %1266
    %v1269 = vmul.f32 %v1252, %v1267
    %v1270 = vpack.c.bf16 %v1269, %v1269
    %1272 = vrot.lane.b32.xlu0 %v1270, 64
    %v1273 = vpop.permute.xlu0 %1272
    %v1275 = vsel %vm199, %v1273, 0
    %1277 = vmatprep.subr.bf16.mxu0 0
    %1278 = vmatpush1.bf16.msra.mxu0 0
    %1279 = vmatprep.subr.bf16.mxu0 0
    %1280 = vmatpush1.bf16.msra.mxu0 0
    %1281 = vmatprep.subr.bf16.mxu0 0
    %1282 = vmatpush1.bf16.msra.mxu0 0
    %1283 = vmatprep.subr.bf16.mxu0 0
    %1284 = vmatpush1.bf16.msra.mxu0 0
    %1285 = vmatprep.subr.bf16.mxu0 0
    %1286 = vmatpush1.bf16.msra.mxu0 0
    %1287 = vmatprep.subr.bf16.mxu0 0
    %1288 = vmatpush1.bf16.msra.mxu0 0
    %1289 = vmatprep.subr.bf16.mxu0 0
    %1290 = vmatpush1.bf16.msra.mxu0 %v909
    %1291 = vmatprep.subr.bf16.mxu0 0
    %1292 = vmatpush1.bf16.msra.mxu0 %v908
    %1293 = vmatprep.subr.bf16.mxu0 0
    %1294 = vmatpush2.bf16.msra.mxu0 0
    %1295 = vmatprep.subr.bf16.mxu0 0
    %1296 = vmatpush2.bf16.msra.mxu0 0
    %1297 = vmatprep.subr.bf16.mxu0 0
    %1298 = vmatpush2.bf16.msra.mxu0 0
    %1299 = vmatprep.subr.bf16.mxu0 0
    %1300 = vmatpush2.bf16.msra.mxu0 0
    %1301 = vmatprep.subr.bf16.mxu0 0
    %1302 = vmatpush2.bf16.msra.mxu0 0
    %1303 = vmatprep.subr.bf16.mxu0 0
    %1304 = vmatpush2.bf16.msra.mxu0 0
    %1305 = vmatprep.subr.bf16.mxu0 0
    %1306 = vmatpush2.bf16.msra.mxu0 0
    %1307 = vmatprep.subr.bf16.mxu0 0
    %1308 = vmatpush2.bf16.msra.mxu0 0
    %1309 = vmatprep.mubr.bf16.mxu0 0
    %1310 = vmatmul.mubr.bf16.gmra.mxu0 %v1275
    %v1311 = vpop.f32.mrf.mxu0
    %v1312 = vadd.f32 0.0, %v1311
    %v1313 = vpop.f32.mrf.mxu0
    %v1314 = vpop.f32.mrf.mxu0
    %v1315 = vpop.f32.mrf.mxu0
    %1316 = vdwg.mxu0
    %v1317 = vadd.f32 %v889, %v1312
    %v1318 = vtanh.pop %v1317
    %v1319 = vxor.u32 %v1317, 2147483648
    %v1320 = vmul.f32 %v1319, 1.442695
    %v1321 = vpow.pop %v1320
    %v1322 = vadd.f32 %v1321, 1.0
    %v1323 = vrcp.pop %v1322
    %v1324 = vmul.f32 1.0, %v1323
    %v1325 = vsel %vm64, %v1318, %v1324
    %v1326 = vmul.f32 %v1325, %v1263
    %1328 = vrot.lane.b32.xlu0 %v1325, 32
    %v1329 = vpop.permute.xlu0 %1328
    %v1331 = vmul.f32 %v1325, %v1329
    %1333 = vrot.lane.b32.xlu0 %v1331, 32
    %v1334 = vpop.permute.xlu0 %1333
    %v1336 = vadd.f32 %v1326, %v1334
    %v1337 = vtanh.pop %v1336
    %1339 = vrot.lane.b32.xlu0 %v1337, 32
    %v1340 = vpop.permute.xlu0 %1339
    %v1342 = vmul.f32 %v1325, %v1340
    %v1343 = vpack.c.bf16 %v1342, %v1342
    %1345 = vrot.lane.b32.xlu0 %v1343, 64
    %v1346 = vpop.permute.xlu0 %1345
    %v1348 = vsel %vm199, %v1346, 0
    %1350 = vmatprep.subr.bf16.mxu0 0
    %1351 = vmatpush1.bf16.msra.mxu0 0
    %1352 = vmatprep.subr.bf16.mxu0 0
    %1353 = vmatpush1.bf16.msra.mxu0 0
    %1354 = vmatprep.subr.bf16.mxu0 0
    %1355 = vmatpush1.bf16.msra.mxu0 0
    %1356 = vmatprep.subr.bf16.mxu0 0
    %1357 = vmatpush1.bf16.msra.mxu0 0
    %1358 = vmatprep.subr.bf16.mxu0 0
    %1359 = vmatpush1.bf16.msra.mxu0 0
    %1360 = vmatprep.subr.bf16.mxu0 0
    %1361 = vmatpush1.bf16.msra.mxu0 0
    %1362 = vmatprep.subr.bf16.mxu0 0
    %1363 = vmatpush1.bf16.msra.mxu0 %v909
    %1364 = vmatprep.subr.bf16.mxu0 0
    %1365 = vmatpush1.bf16.msra.mxu0 %v908
    %1366 = vmatprep.subr.bf16.mxu0 0
    %1367 = vmatpush2.bf16.msra.mxu0 0
    %1368 = vmatprep.subr.bf16.mxu0 0
    %1369 = vmatpush2.bf16.msra.mxu0 0
    %1370 = vmatprep.subr.bf16.mxu0 0
    %1371 = vmatpush2.bf16.msra.mxu0 0
    %1372 = vmatprep.subr.bf16.mxu0 0
    %1373 = vmatpush2.bf16.msra.mxu0 0
    %1374 = vmatprep.subr.bf16.mxu0 0
    %1375 = vmatpush2.bf16.msra.mxu0 0
    %1376 = vmatprep.subr.bf16.mxu0 0
    %1377 = vmatpush2.bf16.msra.mxu0 0
    %1378 = vmatprep.subr.bf16.mxu0 0
    %1379 = vmatpush2.bf16.msra.mxu0 0
    %1380 = vmatprep.subr.bf16.mxu0 0
    %1381 = vmatpush2.bf16.msra.mxu0 0
    %1382 = vmatprep.mubr.bf16.mxu0 0
    %1383 = vmatmul.mubr.bf16.gmra.mxu0 %v1348
    %v1384 = vpop.f32.mrf.mxu0
    %v1385 = vadd.f32 0.0, %v1384
    %v1386 = vpop.f32.mrf.mxu0
    %v1387 = vpop.f32.mrf.mxu0
    %v1388 = vpop.f32.mrf.mxu0
    %1389 = vdwg.mxu0
    %v1390 = vadd.f32 %v894, %v1385
    %v1391 = vtanh.pop %v1390
    %v1392 = vxor.u32 %v1390, 2147483648
    %v1393 = vmul.f32 %v1392, 1.442695
    %v1394 = vpow.pop %v1393
    %v1395 = vadd.f32 %v1394, 1.0
    %v1396 = vrcp.pop %v1395
    %v1397 = vmul.f32 1.0, %v1396
    %v1398 = vsel %vm64, %v1391, %v1397
    %v1399 = vmul.f32 %v1398, %v1336
    %1401 = vrot.lane.b32.xlu0 %v1398, 32
    %v1402 = vpop.permute.xlu0 %1401
    %v1404 = vmul.f32 %v1398, %v1402
    %1406 = vrot.lane.b32.xlu0 %v1404, 32
    %v1407 = vpop.permute.xlu0 %1406
    %v1409 = vadd.f32 %v1399, %v1407
    %v1410 = vtanh.pop %v1409
    %1412 = vrot.lane.b32.xlu0 %v1410, 32
    %v1413 = vpop.permute.xlu0 %1412
    %v1415 = vmul.f32 %v1398, %v1413
    %v1416 = vpack.c.bf16 %v1415, %v1415
    %1418 = vrot.lane.b32.xlu0 %v1416, 64
    %v1419 = vpop.permute.xlu0 %1418
    %v1421 = vsel %vm199, %v1419, 0
    %1423 = vmatprep.subr.bf16.mxu0 0
    %1424 = vmatpush1.bf16.msra.mxu0 0
    %1425 = vmatprep.subr.bf16.mxu0 0
    %1426 = vmatpush1.bf16.msra.mxu0 0
    %1427 = vmatprep.subr.bf16.mxu0 0
    %1428 = vmatpush1.bf16.msra.mxu0 0
    %1429 = vmatprep.subr.bf16.mxu0 0
    %1430 = vmatpush1.bf16.msra.mxu0 0
    %1431 = vmatprep.subr.bf16.mxu0 0
    %1432 = vmatpush1.bf16.msra.mxu0 0
    %1433 = vmatprep.subr.bf16.mxu0 0
    %1434 = vmatpush1.bf16.msra.mxu0 0
    %1435 = vmatprep.subr.bf16.mxu0 0
    %1436 = vmatpush1.bf16.msra.mxu0 %v909
    %1437 = vmatprep.subr.bf16.mxu0 0
    %1438 = vmatpush1.bf16.msra.mxu0 %v908
    %1439 = vmatprep.subr.bf16.mxu0 0
    %1440 = vmatpush2.bf16.msra.mxu0 0
    %1441 = vmatprep.subr.bf16.mxu0 0
    %1442 = vmatpush2.bf16.msra.mxu0 0
    %1443 = vmatprep.subr.bf16.mxu0 0
    %1444 = vmatpush2.bf16.msra.mxu0 0
    %1445 = vmatprep.subr.bf16.mxu0 0
    %1446 = vmatpush2.bf16.msra.mxu0 0
    %1447 = vmatprep.subr.bf16.mxu0 0
    %1448 = vmatpush2.bf16.msra.mxu0 0
    %1449 = vmatprep.subr.bf16.mxu0 0
    %1450 = vmatpush2.bf16.msra.mxu0 0
    %1451 = vmatprep.subr.bf16.mxu0 0
    %1452 = vmatpush2.bf16.msra.mxu0 0
    %1453 = vmatprep.subr.bf16.mxu0 0
    %1454 = vmatpush2.bf16.msra.mxu0 0
    %1455 = vmatprep.mubr.bf16.mxu0 0
    %1456 = vmatmul.mubr.bf16.gmra.mxu0 %v1421
    %v1457 = vpop.f32.mrf.mxu0
    %v1458 = vadd.f32 0.0, %v1457
    %v1459 = vpop.f32.mrf.mxu0
    %v1460 = vpop.f32.mrf.mxu0
    %v1461 = vpop.f32.mrf.mxu0
    %1462 = vdwg.mxu0
    %v1463 = vadd.f32 %v897, %v1458
    %v1464 = vtanh.pop %v1463
    %v1465 = vxor.u32 %v1463, 2147483648
    %v1466 = vmul.f32 %v1465, 1.442695
    %v1467 = vpow.pop %v1466
    %v1468 = vadd.f32 %v1467, 1.0
    %v1469 = vrcp.pop %v1468
    %v1470 = vmul.f32 1.0, %v1469
    %v1471 = vsel %vm64, %v1464, %v1470
    %v1472 = vmul.f32 %v1471, %v1409
    %1474 = vrot.lane.b32.xlu0 %v1471, 32
    %v1475 = vpop.permute.xlu0 %1474
    %v1477 = vmul.f32 %v1471, %v1475
    %1479 = vrot.lane.b32.xlu0 %v1477, 32
    %v1480 = vpop.permute.xlu0 %1479
    %v1482 = vadd.f32 %v1472, %v1480
    %v1483 = vtanh.pop %v1482
    %1485 = vrot.lane.b32.xlu0 %v1483, 32
    %v1486 = vpop.permute.xlu0 %1485
    %v1488 = vmul.f32 %v1471, %v1486
    %v1489 = vpack.c.bf16 %v1488, %v1488
    %v1490 = vld [vmem:[#allocation5] sm:$0xf]
    %v1491 = vld [vmem:[#allocation5 + $0x4] sm:$0xf]
    %v1492 = vld [vmem:[#allocation5 + $0x8] sm:$0xf]
    %v1493 = vld [vmem:[#allocation5 + $0xc] sm:$0xf]
    %v1494 = vld [vmem:[%s8] sm:$0x1]
    %v1496 = vlaneseq
    %v1497 = vshrl.u32 %v1496, 7
    %v1498 = vsub.s32 0, %v1497
    %v1499 = vrot.slane %v1494, %v1498
    %1502 = vrot.lane.b32.xlu0 %v1489, 64
    %v1503 = vpop.permute.xlu0 %1502
    %v1508 = vunpack.c.l.b16 %v1490
    %v1509 = vunpack.c.l.b16 %v1491
    %v1510 = vunpack.c.l.b16 %v1492
    %v1511 = vunpack.c.l.b16 %v1493
    %v1512 = vpack.c.b16 %v1509, %v1508
    %v1513 = vpack.c.b16 %v1511, %v1510
    %v1517 = vsel %vm199, %v1503, 0
    %1519 = vmatprep.subr.bf16.mxu0 0
    %1520 = vmatpush1.bf16.msra.mxu0 0
    %1521 = vmatprep.subr.bf16.mxu0 0
    %1522 = vmatpush1.bf16.msra.mxu0 0
    %1523 = vmatprep.subr.bf16.mxu0 0
    %1524 = vmatpush1.bf16.msra.mxu0 0
    %1525 = vmatprep.subr.bf16.mxu0 0
    %1526 = vmatpush1.bf16.msra.mxu0 0
    %1527 = vmatprep.subr.bf16.mxu0 0
    %1528 = vmatpush1.bf16.msra.mxu0 0
    %1529 = vmatprep.subr.bf16.mxu0 0
    %1530 = vmatpush1.bf16.msra.mxu0 0
    %1531 = vmatprep.subr.bf16.mxu0 0
    %1532 = vmatpush1.bf16.msra.mxu0 %v1513
    %1533 = vmatprep.subr.bf16.mxu0 0
    %1534 = vmatpush1.bf16.msra.mxu0 %v1512
    %1535 = vmatprep.subr.bf16.mxu0 0
    %1536 = vmatpush2.bf16.msra.mxu0 0
    %1537 = vmatprep.subr.bf16.mxu0 0
    %1538 = vmatpush2.bf16.msra.mxu0 0
    %1539 = vmatprep.subr.bf16.mxu0 0
    %1540 = vmatpush2.bf16.msra.mxu0 0
    %1541 = vmatprep.subr.bf16.mxu0 0
    %1542 = vmatpush2.bf16.msra.mxu0 0
    %1543 = vmatprep.subr.bf16.mxu0 0
    %1544 = vmatpush2.bf16.msra.mxu0 0
    %1545 = vmatprep.subr.bf16.mxu0 0
    %1546 = vmatpush2.bf16.msra.mxu0 0
    %1547 = vmatprep.subr.bf16.mxu0 0
    %1548 = vmatpush2.bf16.msra.mxu0 0
    %1549 = vmatprep.subr.bf16.mxu0 0
    %1550 = vmatpush2.bf16.msra.mxu0 0
    %1551 = vmatprep.mubr.bf16.mxu0 0
    %1552 = vmatmul.mubr.bf16.gmra.mxu0 %v1517
    %v1553 = vpop.f32.mrf.mxu0
    %v1554 = vadd.f32 %v1499, %v1553
    %v1555 = vpop.f32.mrf.mxu0
    %v1556 = vpop.f32.mrf.mxu0
    %v1557 = vpop.f32.mrf.mxu0
    %1558 = vdwg.mxu0
    %1559 = vst [vmem:[#allocation7] sm:$0xff] %v1554
    // Predicated region
    $region46: #{tpu_custom_call.1} parent=1 // pred_check
      _
    $region47: #{tpu_custom_call.1} parent=1 // pred_check_branch
      %1561 = sbr.rel (0) target = $region49
    $region48: #{tpu_custom_call.1} parent=1 // pred_region
      %s1563 = ssub.s32 128, 128
      %1564 = vsyncadd [#allocation4], %s1563
      %s1566 = sshll.u32 [#allocation7], 4
      %s1567 = int_to_ptr.vmem [resolvable:$true] %s1566
      %1569 = dma.vmem_to_hbm [thread:$0]  %s1567, 128, %s9, [#allocation4]
    $region49: #{tpu_custom_call.1} parent=1 // pred_fallthru
      _
    // Predicated region
    $region50: #{tpu_custom_call.1} parent=1 // pred_check
      _
    $region51: #{tpu_custom_call.1} parent=1 // pred_check_branch
      %1571 = sbr.rel (0) target = $region53
    $region52: #{tpu_custom_call.1} parent=1 // pred_region
      %1572 = dma.done [#allocation4], 128
    $region53: #{tpu_custom_call.1} parent=1 // pred_fallthru
      _
    %1573 = vsyncpa [#allocation3], 1
    %1574 = vsyncpa [#allocation6], 1
    %1575 = vsyncpa [#allocation4], 1

</llo_original>
